<compile_context>
chip_gen: v6e
topology: v6e:2x2x1
jax: 0.10.0
libtpu: 0.0.40
codegen_flags: <defaults>
</compile_context>

<pallas_src>
import functools

import jax
import jax.numpy as jnp
from jax import lax
from jax.experimental import pallas as pl
from jax.experimental.pallas import tpu as pltpu

EPS = 1e-5  # PyTorch InstanceNorm2d default eps (affine=False, biased variance)


def _resblock_kernel(x_ref, mask_ref, w1_ref, w2_ref, o_ref, scr_ref, *,
                     width, c_in):
    # x_ref    : (1, Cp, HW)      one batch element, spatial flattened in lanes
    # mask_ref : (9, HW) f32      border-validity mask per 3x3 tap (row-major)
    # w1_ref   : (3, 3, Cp, Cp)   conv1 weight laid out as (kh, kw, c_out, c_in)
    # w2_ref   : (3, 3, Cp, Cp)   conv2 weight
    # o_ref    : (1, Cp, HW)
    # scr_ref  : (Cp, HW + 2*PAD) flat staging buffer for lane-shifted taps
    _, cp, hw = x_ref.shape
    pad = (scr_ref.shape[1] - hw) // 2   # static lane offset of the interior

    def conv3x3(inp, w_ref):
        # inp: (Cp, HW) f32. Stage into the scratch interior, then read the 9
        # taps as static lane-offset windows. Out-of-bounds contributions are
        # removed with jnp.where on the precomputed masks, so the pad lanes of
        # the scratch never need initialization (select, not multiply: stale
        # or NaN pad contents cannot leak through, and this stays correct even
        # when the batch axis is sharded across TensorCores).
        scr_ref[:, pl.ds(pad, hw)] = inp
        acc = jnp.zeros((cp, hw), jnp.float32)
        for kh in range(3):
            dh = kh - 1
            for kw in range(3):
                dw = kw - 1
                tap = scr_ref[:, pl.ds(pad + dh * width + dw, hw)]  # (Cp, HW)
                if dh != 0 or dw != 0:
                    m = mask_ref[pl.ds(kh * 3 + kw, 1), :]          # (1, HW)
                    tap = jnp.where(m > 0.0, tap, 0.0)
                w_tap = w_ref[kh, kw]                               # (Cp, Cp)
                # Channel mixing on the VPU: (Cp,1) x (1,HW) broadcast FMAs.
                for ci in range(c_in):  # padded input channels are all zero
                    acc = acc + w_tap[:, ci:ci + 1] * tap[ci:ci + 1, :]
        return acc

    def instance_norm(y):
        # Fused single pass: biased variance via E[y^2] - mean^2.
        inv_n = 1.0 / hw
        mean = jnp.sum(y, axis=1, keepdims=True) * inv_n
        ex2 = jnp.sum(y * y, axis=1, keepdims=True) * inv_n
        var = jnp.maximum(ex2 - mean * mean, 0.0)
        return (y - mean) * lax.rsqrt(var + EPS)

    y = conv3x3(x_ref[0].astype(jnp.float32), w1_ref)
    y = instance_norm(y)
    y = jnp.maximum(y, 0.0)                      # ReLU
    y = conv3x3(y, w2_ref)
    y = instance_norm(y)

    # Residual add: re-read the input instead of keeping it live across both
    # convs and norms.
    o_ref[0] = (x_ref[0].astype(jnp.float32) + y).astype(o_ref.dtype)


@jax.jit
def resblock_pallas(x_nchw, w1_oihw, w2_oihw):
    """x_nchw: (N, C, H, W) float32; weights: (C, C, 3, 3) float32 (OIHW)."""
    N, C, H, W = x_nchw.shape
    HW = H * W
    Cp = ((C + 7) // 8) * 8                      # channels -> full sublanes
    PAD = ((W + 1 + 127) // 128) * 128           # halo for lane-shifted taps

    x_flat = x_nchw.reshape(N, C, HW).astype(jnp.float32)
    x_flat = jnp.pad(x_flat, ((0, 0), (0, Cp - C), (0, 0)))

    def prep_w(w_oihw):
        # OIHW (Cout, Cin, kh, kw) -> (kh, kw, Cout, Cin), zero-pad channels.
        w = jnp.transpose(w_oihw, (2, 3, 0, 1)).astype(jnp.float32)
        return jnp.pad(w, ((0, 0), (0, 0), (0, Cp - C), (0, Cp - C)))

    w1 = prep_w(w1_oihw)
    w2 = prep_w(w2_oihw)

    # Border-validity masks for the 9 taps (computed once here so the kernel
    # needs no integer div/mod and no in-kernel reshapes).
    hh = jnp.arange(H, dtype=jnp.int32).reshape(H, 1)
    ww = jnp.arange(W, dtype=jnp.int32).reshape(1, W)
    rows = []
    for dh in (-1, 0, 1):
        for dw in (-1, 0, 1):
            valid = ((hh + dh >= 0) & (hh + dh <= H - 1) &
                     (ww + dw >= 0) & (ww + dw <= W - 1))
            rows.append(jnp.broadcast_to(valid, (H, W)).reshape(HW))
    masks = jnp.stack(rows, axis=0).astype(jnp.float32)        # (9, HW)

    kernel = functools.partial(_resblock_kernel, width=W, c_in=C)

    out_flat = pl.pallas_call(
        kernel,
        out_shape=jax.ShapeDtypeStruct((N, Cp, HW), jnp.float32),
        grid_spec=pltpu.PrefetchScalarGridSpec(
            num_scalar_prefetch=0,
            grid=(N,),
            in_specs=[
                pl.BlockSpec((1, Cp, HW), lambda n: (n, 0, 0)),
                pl.BlockSpec((9, HW), lambda n: (0, 0)),
                pl.BlockSpec((3, 3, Cp, Cp), lambda n: (0, 0, 0, 0)),
                pl.BlockSpec((3, 3, Cp, Cp), lambda n: (0, 0, 0, 0)),
            ],
            out_specs=pl.BlockSpec((1, Cp, HW), lambda n: (n, 0, 0)),
            scratch_shapes=[pltpu.VMEM((Cp, HW + 2 * PAD), jnp.float32)],
        ),
        compiler_params=pltpu.CompilerParams(
            dimension_semantics=("parallel",)),
    )(x_flat, masks, w1, w2)

    return out_flat[:, :C, :].reshape(N, C, H, W)


def resblock_reference(x_nchw, w1_oihw, w2_oihw):
    """Pure-JAX reference of the PyTorch ResBlock forward (NCHW)."""
    def conv(x, w):
        return lax.conv_general_dilated(
            x, w, window_strides=(1, 1), padding="SAME",
            dimension_numbers=("NCHW", "OIHW", "NCHW"))

    def inorm(y):
        mean = jnp.mean(y, axis=(2, 3), keepdims=True)
        var = jnp.mean((y - mean) ** 2, axis=(2, 3), keepdims=True)
        return (y - mean) * lax.rsqrt(var + EPS)

    y = conv(x_nchw, w1_oihw)
    y = inorm(y)
    y = jnp.maximum(y, 0.0)
    y = conv(y, w2_oihw)
    y = inorm(y)
    return x_nchw + y


if __name__ == "__main__":
    N, C, H, W = 2, 4, 16, 16

    key = jax.random.PRNGKey(0)
    kx, k1, k2 = jax.random.split(key, 3)
    x = jax.random.normal(kx, (N, C, H, W), dtype=jnp.float32)
    # Deterministic synthetic Conv2d weights (PyTorch OIHW layout, bias=False).
    fan_in = C * 3 * 3
    w1 = jax.random.normal(k1, (C, C, 3, 3), dtype=jnp.float32) / jnp.sqrt(fan_in)
    w2 = jax.random.normal(k2, (C, C, 3, 3), dtype=jnp.float32) / jnp.sqrt(fan_in)

    out = jax.block_until_ready(resblock_pallas(x, w1, w2))
    ref = jax.block_until_ready(resblock_reference(x, w1, w2))

    assert out.shape == (N, C, H, W)
    assert jnp.allclose(out, ref, rtol=1e-2, atol=1e-2), (
        float(jnp.max(jnp.abs(out - ref))))

    print("KERNEL_OK")
</pallas_src>

<mosaic_0001>
module attributes {stable_mosaic.version = 11 : i64} {
  func.func @_resblock_kernel(%arg0: i32, %arg1: memref<1x8x256xf32, #tpu.memory_space<vmem>>, %arg2: memref<9x256xf32, #tpu.memory_space<vmem>>, %arg3: memref<3x3x8x8xf32, #tpu.memory_space<vmem>>, %arg4: memref<3x3x8x8xf32, #tpu.memory_space<vmem>>, %arg5: memref<1x8x256xf32, #tpu.memory_space<vmem>>, %arg6: memref<8x512xf32, #tpu.memory_space<vmem>>) attributes {dimension_semantics = [#tpu.dimension_semantics<parallel>], iteration_bounds = array<i64: 2>, scalar_prefetch = 0 : i64, scratch_operands = 1 : i64, tpu.core_type = #tpu.core_type<tc>, window_params = [{transform_indices = @transform_0, window_bounds = array<i64: 1, 8, 256>}, {pipeline_mode = #tpu.pipeline_mode<synchronous>, transform_indices = @transform_1, window_bounds = array<i64: 9, 256>}, {pipeline_mode = #tpu.pipeline_mode<synchronous>, transform_indices = @transform_2, window_bounds = array<i64: 3, 3, 8, 8>}, {pipeline_mode = #tpu.pipeline_mode<synchronous>, transform_indices = @transform_3, window_bounds = array<i64: 3, 3, 8, 8>}, {transform_indices = @transform_4, window_bounds = array<i64: 1, 8, 256>}]} {
    %c0 = arith.constant 0 : index
    %c0_0 = arith.constant 0 : index
    %c0_1 = arith.constant 0 : index
    %0 = vector.load %arg1[%c0, %c0_0, %c0_1] : memref<1x8x256xf32, #tpu.memory_space<vmem>>, vector<1x8x256xf32>
    %1 = vector.shape_cast %0 : vector<1x8x256xf32> to vector<8x256xf32>
    %c0_2 = arith.constant 0 : index
    %c128 = arith.constant 128 : index
    %2 = vector.load %arg6[%c0_2, %c128] : memref<8x512xf32, #tpu.memory_space<vmem>>, vector<8x256xf32>
    tpu.vector_store %arg6[%c0_2, %c128], %1 {strides = array<i32>} : memref<8x512xf32, #tpu.memory_space<vmem>>, vector<8x256xf32>,
    %cst = arith.constant 0.000000e+00 : f32
    %3 = vector.broadcast %cst : f32 to vector<8x256xf32>
    %c0_3 = arith.constant 0 : index
    %c111 = arith.constant 111 : index
    %4 = vector.load %arg6[%c0_3, %c111] : memref<8x512xf32, #tpu.memory_space<vmem>>, vector<8x256xf32>
    %c0_4 = arith.constant 0 : index
    %c0_5 = arith.constant 0 : index
    %5 = vector.load %arg2[%c0_4, %c0_5] : memref<9x256xf32, #tpu.memory_space<vmem>>, vector<1x256xf32>
    %cst_6 = arith.constant 0.000000e+00 : f32
    %6 = vector.broadcast %cst_6 : f32 to vector<1x256xf32>
    %7 = arith.cmpf ogt, %5, %6 : vector<1x256xf32>
    %cst_7 = arith.constant 0.000000e+00 : f32
    %8 = vector.shape_cast %7 : vector<1x256xi1> to vector<1x256xi1>
    %9 = vector.broadcast %8 : vector<1x256xi1> to vector<8x256xi1>
    %10 = vector.broadcast %cst_7 : f32 to vector<8x256xf32>
    %11 = arith.select %9, %4, %10 : vector<8x256xi1>, vector<8x256xf32>
    %c0_8 = arith.constant 0 : index
    %c0_9 = arith.constant 0 : index
    %c0_10 = arith.constant 0 : index
    %c0_11 = arith.constant 0 : index
    %12 = vector.load %arg3[%c0_8, %c0_9, %c0_10, %c0_11] : memref<3x3x8x8xf32, #tpu.memory_space<vmem>>, vector<1x1x8x8xf32>
    %13 = vector.shape_cast %12 : vector<1x1x8x8xf32> to vector<8x8xf32>
    %14 = vector.extract_strided_slice %13 {offsets = [0, 0], sizes = [8, 1], strides = [1, 1]} : vector<8x8xf32> to vector<8x1xf32>
    %15 = vector.extract_strided_slice %11 {offsets = [0, 0], sizes = [1, 256], strides = [1, 1]} : vector<8x256xf32> to vector<1x256xf32>
    %16 = vector.broadcast %14 : vector<8x1xf32> to vector<8x256xf32>
    %17 = vector.broadcast %15 : vector<1x256xf32> to vector<8x256xf32>
    %18 = arith.mulf %16, %17 : vector<8x256xf32>
    %19 = arith.addf %3, %18 : vector<8x256xf32>
    %20 = vector.extract_strided_slice %13 {offsets = [0, 1], sizes = [8, 1], strides = [1, 1]} : vector<8x8xf32> to vector<8x1xf32>
    %21 = vector.extract_strided_slice %11 {offsets = [1, 0], sizes = [1, 256], strides = [1, 1]} : vector<8x256xf32> to vector<1x256xf32>
    %22 = vector.broadcast %20 : vector<8x1xf32> to vector<8x256xf32>
    %23 = vector.broadcast %21 : vector<1x256xf32> to vector<8x256xf32>
    %24 = arith.mulf %22, %23 : vector<8x256xf32>
    %25 = arith.addf %19, %24 : vector<8x256xf32>
    %26 = vector.extract_strided_slice %13 {offsets = [0, 2], sizes = [8, 1], strides = [1, 1]} : vector<8x8xf32> to vector<8x1xf32>
    %27 = vector.extract_strided_slice %11 {offsets = [2, 0], sizes = [1, 256], strides = [1, 1]} : vector<8x256xf32> to vector<1x256xf32>
    %28 = vector.broadcast %26 : vector<8x1xf32> to vector<8x256xf32>
    %29 = vector.broadcast %27 : vector<1x256xf32> to vector<8x256xf32>
    %30 = arith.mulf %28, %29 : vector<8x256xf32>
    %31 = arith.addf %25, %30 : vector<8x256xf32>
    %32 = vector.extract_strided_slice %13 {offsets = [0, 3], sizes = [8, 1], strides = [1, 1]} : vector<8x8xf32> to vector<8x1xf32>
    %33 = vector.extract_strided_slice %11 {offsets = [3, 0], sizes = [1, 256], strides = [1, 1]} : vector<8x256xf32> to vector<1x256xf32>
    %34 = vector.broadcast %32 : vector<8x1xf32> to vector<8x256xf32>
    %35 = vector.broadcast %33 : vector<1x256xf32> to vector<8x256xf32>
    %36 = arith.mulf %34, %35 : vector<8x256xf32>
    %37 = arith.addf %31, %36 : vector<8x256xf32>
    %c0_12 = arith.constant 0 : index
    %c112 = arith.constant 112 : index
    %38 = vector.load %arg6[%c0_12, %c112] : memref<8x512xf32, #tpu.memory_space<vmem>>, vector<8x256xf32>
    %c1 = arith.constant 1 : index
    %c0_13 = arith.constant 0 : index
    %39 = vector.load %arg2[%c1, %c0_13] : memref<9x256xf32, #tpu.memory_space<vmem>>, vector<1x256xf32>
    %cst_14 = arith.constant 0.000000e+00 : f32
    %40 = vector.broadcast %cst_14 : f32 to vector<1x256xf32>
    %41 = arith.cmpf ogt, %39, %40 : vector<1x256xf32>
    %cst_15 = arith.constant 0.000000e+00 : f32
    %42 = vector.shape_cast %41 : vector<1x256xi1> to vector<1x256xi1>
    %43 = vector.broadcast %42 : vector<1x256xi1> to vector<8x256xi1>
    %44 = vector.broadcast %cst_15 : f32 to vector<8x256xf32>
    %45 = arith.select %43, %38, %44 : vector<8x256xi1>, vector<8x256xf32>
    %c0_16 = arith.constant 0 : index
    %c1_17 = arith.constant 1 : index
    %c0_18 = arith.constant 0 : index
    %c0_19 = arith.constant 0 : index
    %46 = vector.load %arg3[%c0_16, %c1_17, %c0_18, %c0_19] : memref<3x3x8x8xf32, #tpu.memory_space<vmem>>, vector<1x1x8x8xf32>
    %47 = vector.shape_cast %46 : vector<1x1x8x8xf32> to vector<8x8xf32>
    %48 = vector.extract_strided_slice %47 {offsets = [0, 0], sizes = [8, 1], strides = [1, 1]} : vector<8x8xf32> to vector<8x1xf32>
    %49 = vector.extract_strided_slice %45 {offsets = [0, 0], sizes = [1, 256], strides = [1, 1]} : vector<8x256xf32> to vector<1x256xf32>
    %50 = vector.broadcast %48 : vector<8x1xf32> to vector<8x256xf32>
    %51 = vector.broadcast %49 : vector<1x256xf32> to vector<8x256xf32>
    %52 = arith.mulf %50, %51 : vector<8x256xf32>
    %53 = arith.addf %37, %52 : vector<8x256xf32>
    %54 = vector.extract_strided_slice %47 {offsets = [0, 1], sizes = [8, 1], strides = [1, 1]} : vector<8x8xf32> to vector<8x1xf32>
    %55 = vector.extract_strided_slice %45 {offsets = [1, 0], sizes = [1, 256], strides = [1, 1]} : vector<8x256xf32> to vector<1x256xf32>
    %56 = vector.broadcast %54 : vector<8x1xf32> to vector<8x256xf32>
    %57 = vector.broadcast %55 : vector<1x256xf32> to vector<8x256xf32>
    %58 = arith.mulf %56, %57 : vector<8x256xf32>
    %59 = arith.addf %53, %58 : vector<8x256xf32>
    %60 = vector.extract_strided_slice %47 {offsets = [0, 2], sizes = [8, 1], strides = [1, 1]} : vector<8x8xf32> to vector<8x1xf32>
    %61 = vector.extract_strided_slice %45 {offsets = [2, 0], sizes = [1, 256], strides = [1, 1]} : vector<8x256xf32> to vector<1x256xf32>
    %62 = vector.broadcast %60 : vector<8x1xf32> to vector<8x256xf32>
    %63 = vector.broadcast %61 : vector<1x256xf32> to vector<8x256xf32>
    %64 = arith.mulf %62, %63 : vector<8x256xf32>
    %65 = arith.addf %59, %64 : vector<8x256xf32>
    %66 = vector.extract_strided_slice %47 {offsets = [0, 3], sizes = [8, 1], strides = [1, 1]} : vector<8x8xf32> to vector<8x1xf32>
    %67 = vector.extract_strided_slice %45 {offsets = [3, 0], sizes = [1, 256], strides = [1, 1]} : vector<8x256xf32> to vector<1x256xf32>
    %68 = vector.broadcast %66 : vector<8x1xf32> to vector<8x256xf32>
    %69 = vector.broadcast %67 : vector<1x256xf32> to vector<8x256xf32>
    %70 = arith.mulf %68, %69 : vector<8x256xf32>
    %71 = arith.addf %65, %70 : vector<8x256xf32>
    %c0_20 = arith.constant 0 : index
    %c113 = arith.constant 113 : index
    %72 = vector.load %arg6[%c0_20, %c113] : memref<8x512xf32, #tpu.memory_space<vmem>>, vector<8x256xf32>
    %c2 = arith.constant 2 : index
    %c0_21 = arith.constant 0 : index
    %73 = vector.load %arg2[%c2, %c0_21] : memref<9x256xf32, #tpu.memory_space<vmem>>, vector<1x256xf32>
    %cst_22 = arith.constant 0.000000e+00 : f32
    %74 = vector.broadcast %cst_22 : f32 to vector<1x256xf32>
    %75 = arith.cmpf ogt, %73, %74 : vector<1x256xf32>
    %cst_23 = arith.constant 0.000000e+00 : f32
    %76 = vector.shape_cast %75 : vector<1x256xi1> to vector<1x256xi1>
    %77 = vector.broadcast %76 : vector<1x256xi1> to vector<8x256xi1>
    %78 = vector.broadcast %cst_23 : f32 to vector<8x256xf32>
    %79 = arith.select %77, %72, %78 : vector<8x256xi1>, vector<8x256xf32>
    %c0_24 = arith.constant 0 : index
    %c2_25 = arith.constant 2 : index
    %c0_26 = arith.constant 0 : index
    %c0_27 = arith.constant 0 : index
    %80 = vector.load %arg3[%c0_24, %c2_25, %c0_26, %c0_27] : memref<3x3x8x8xf32, #tpu.memory_space<vmem>>, vector<1x1x8x8xf32>
    %81 = vector.shape_cast %80 : vector<1x1x8x8xf32> to vector<8x8xf32>
    %82 = vector.extract_strided_slice %81 {offsets = [0, 0], sizes = [8, 1], strides = [1, 1]} : vector<8x8xf32> to vector<8x1xf32>
    %83 = vector.extract_strided_slice %79 {offsets = [0, 0], sizes = [1, 256], strides = [1, 1]} : vector<8x256xf32> to vector<1x256xf32>
    %84 = vector.broadcast %82 : vector<8x1xf32> to vector<8x256xf32>
    %85 = vector.broadcast %83 : vector<1x256xf32> to vector<8x256xf32>
    %86 = arith.mulf %84, %85 : vector<8x256xf32>
    %87 = arith.addf %71, %86 : vector<8x256xf32>
    %88 = vector.extract_strided_slice %81 {offsets = [0, 1], sizes = [8, 1], strides = [1, 1]} : vector<8x8xf32> to vector<8x1xf32>
    %89 = vector.extract_strided_slice %79 {offsets = [1, 0], sizes = [1, 256], strides = [1, 1]} : vector<8x256xf32> to vector<1x256xf32>
    %90 = vector.broadcast %88 : vector<8x1xf32> to vector<8x256xf32>
    %91 = vector.broadcast %89 : vector<1x256xf32> to vector<8x256xf32>
    %92 = arith.mulf %90, %91 : vector<8x256xf32>
    %93 = arith.addf %87, %92 : vector<8x256xf32>
    %94 = vector.extract_strided_slice %81 {offsets = [0, 2], sizes = [8, 1], strides = [1, 1]} : vector<8x8xf32> to vector<8x1xf32>
    %95 = vector.extract_strided_slice %79 {offsets = [2, 0], sizes = [1, 256], strides = [1, 1]} : vector<8x256xf32> to vector<1x256xf32>
    %96 = vector.broadcast %94 : vector<8x1xf32> to vector<8x256xf32>
    %97 = vector.broadcast %95 : vector<1x256xf32> to vector<8x256xf32>
    %98 = arith.mulf %96, %97 : vector<8x256xf32>
    %99 = arith.addf %93, %98 : vector<8x256xf32>
    %100 = vector.extract_strided_slice %81 {offsets = [0, 3], sizes = [8, 1], strides = [1, 1]} : vector<8x8xf32> to vector<8x1xf32>
    %101 = vector.extract_strided_slice %79 {offsets = [3, 0], sizes = [1, 256], strides = [1, 1]} : vector<8x256xf32> to vector<1x256xf32>
    %102 = vector.broadcast %100 : vector<8x1xf32> to vector<8x256xf32>
    %103 = vector.broadcast %101 : vector<1x256xf32> to vector<8x256xf32>
    %104 = arith.mulf %102, %103 : vector<8x256xf32>
    %105 = arith.addf %99, %104 : vector<8x256xf32>
    %c0_28 = arith.constant 0 : index
    %c127 = arith.constant 127 : index
    %106 = vector.load %arg6[%c0_28, %c127] : memref<8x512xf32, #tpu.memory_space<vmem>>, vector<8x256xf32>
    %c3 = arith.constant 3 : index
    %c0_29 = arith.constant 0 : index
    %107 = vector.load %arg2[%c3, %c0_29] : memref<9x256xf32, #tpu.memory_space<vmem>>, vector<1x256xf32>
    %cst_30 = arith.constant 0.000000e+00 : f32
    %108 = vector.broadcast %cst_30 : f32 to vector<1x256xf32>
    %109 = arith.cmpf ogt, %107, %108 : vector<1x256xf32>
    %cst_31 = arith.constant 0.000000e+00 : f32
    %110 = vector.shape_cast %109 : vector<1x256xi1> to vector<1x256xi1>
    %111 = vector.broadcast %110 : vector<1x256xi1> to vector<8x256xi1>
    %112 = vector.broadcast %cst_31 : f32 to vector<8x256xf32>
    %113 = arith.select %111, %106, %112 : vector<8x256xi1>, vector<8x256xf32>
    %c1_32 = arith.constant 1 : index
    %c0_33 = arith.constant 0 : index
    %c0_34 = arith.constant 0 : index
    %c0_35 = arith.constant 0 : index
    %114 = vector.load %arg3[%c1_32, %c0_33, %c0_34, %c0_35] : memref<3x3x8x8xf32, #tpu.memory_space<vmem>>, vector<1x1x8x8xf32>
    %115 = vector.shape_cast %114 : vector<1x1x8x8xf32> to vector<8x8xf32>
    %116 = vector.extract_strided_slice %115 {offsets = [0, 0], sizes = [8, 1], strides = [1, 1]} : vector<8x8xf32> to vector<8x1xf32>
    %117 = vector.extract_strided_slice %113 {offsets = [0, 0], sizes = [1, 256], strides = [1, 1]} : vector<8x256xf32> to vector<1x256xf32>
    %118 = vector.broadcast %116 : vector<8x1xf32> to vector<8x256xf32>
    %119 = vector.broadcast %117 : vector<1x256xf32> to vector<8x256xf32>
    %120 = arith.mulf %118, %119 : vector<8x256xf32>
    %121 = arith.addf %105, %120 : vector<8x256xf32>
    %122 = vector.extract_strided_slice %115 {offsets = [0, 1], sizes = [8, 1], strides = [1, 1]} : vector<8x8xf32> to vector<8x1xf32>
    %123 = vector.extract_strided_slice %113 {offsets = [1, 0], sizes = [1, 256], strides = [1, 1]} : vector<8x256xf32> to vector<1x256xf32>
    %124 = vector.broadcast %122 : vector<8x1xf32> to vector<8x256xf32>
    %125 = vector.broadcast %123 : vector<1x256xf32> to vector<8x256xf32>
    %126 = arith.mulf %124, %125 : vector<8x256xf32>
    %127 = arith.addf %121, %126 : vector<8x256xf32>
    %128 = vector.extract_strided_slice %115 {offsets = [0, 2], sizes = [8, 1], strides = [1, 1]} : vector<8x8xf32> to vector<8x1xf32>
    %129 = vector.extract_strided_slice %113 {offsets = [2, 0], sizes = [1, 256], strides = [1, 1]} : vector<8x256xf32> to vector<1x256xf32>
    %130 = vector.broadcast %128 : vector<8x1xf32> to vector<8x256xf32>
    %131 = vector.broadcast %129 : vector<1x256xf32> to vector<8x256xf32>
    %132 = arith.mulf %130, %131 : vector<8x256xf32>
    %133 = arith.addf %127, %132 : vector<8x256xf32>
    %134 = vector.extract_strided_slice %115 {offsets = [0, 3], sizes = [8, 1], strides = [1, 1]} : vector<8x8xf32> to vector<8x1xf32>
    %135 = vector.extract_strided_slice %113 {offsets = [3, 0], sizes = [1, 256], strides = [1, 1]} : vector<8x256xf32> to vector<1x256xf32>
    %136 = vector.broadcast %134 : vector<8x1xf32> to vector<8x256xf32>
    %137 = vector.broadcast %135 : vector<1x256xf32> to vector<8x256xf32>
    %138 = arith.mulf %136, %137 : vector<8x256xf32>
    %139 = arith.addf %133, %138 : vector<8x256xf32>
    %c0_36 = arith.constant 0 : index
    %c128_37 = arith.constant 128 : index
    %140 = vector.load %arg6[%c0_36, %c128_37] : memref<8x512xf32, #tpu.memory_space<vmem>>, vector<8x256xf32>
    %c1_38 = arith.constant 1 : index
    %c1_39 = arith.constant 1 : index
    %c0_40 = arith.constant 0 : index
    %c0_41 = arith.constant 0 : index
    %141 = vector.load %arg3[%c1_38, %c1_39, %c0_40, %c0_41] : memref<3x3x8x8xf32, #tpu.memory_space<vmem>>, vector<1x1x8x8xf32>
    %142 = vector.shape_cast %141 : vector<1x1x8x8xf32> to vector<8x8xf32>
    %143 = vector.extract_strided_slice %142 {offsets = [0, 0], sizes = [8, 1], strides = [1, 1]} : vector<8x8xf32> to vector<8x1xf32>
    %144 = vector.extract_strided_slice %140 {offsets = [0, 0], sizes = [1, 256], strides = [1, 1]} : vector<8x256xf32> to vector<1x256xf32>
    %145 = vector.broadcast %143 : vector<8x1xf32> to vector<8x256xf32>
    %146 = vector.broadcast %144 : vector<1x256xf32> to vector<8x256xf32>
    %147 = arith.mulf %145, %146 : vector<8x256xf32>
    %148 = arith.addf %139, %147 : vector<8x256xf32>
    %149 = vector.extract_strided_slice %142 {offsets = [0, 1], sizes = [8, 1], strides = [1, 1]} : vector<8x8xf32> to vector<8x1xf32>
    %150 = vector.extract_strided_slice %140 {offsets = [1, 0], sizes = [1, 256], strides = [1, 1]} : vector<8x256xf32> to vector<1x256xf32>
    %151 = vector.broadcast %149 : vector<8x1xf32> to vector<8x256xf32>
    %152 = vector.broadcast %150 : vector<1x256xf32> to vector<8x256xf32>
    %153 = arith.mulf %151, %152 : vector<8x256xf32>
    %154 = arith.addf %148, %153 : vector<8x256xf32>
    %155 = vector.extract_strided_slice %142 {offsets = [0, 2], sizes = [8, 1], strides = [1, 1]} : vector<8x8xf32> to vector<8x1xf32>
    %156 = vector.extract_strided_slice %140 {offsets = [2, 0], sizes = [1, 256], strides = [1, 1]} : vector<8x256xf32> to vector<1x256xf32>
    %157 = vector.broadcast %155 : vector<8x1xf32> to vector<8x256xf32>
    %158 = vector.broadcast %156 : vector<1x256xf32> to vector<8x256xf32>
    %159 = arith.mulf %157, %158 : vector<8x256xf32>
    %160 = arith.addf %154, %159 : vector<8x256xf32>
    %161 = vector.extract_strided_slice %142 {offsets = [0, 3], sizes = [8, 1], strides = [1, 1]} : vector<8x8xf32> to vector<8x1xf32>
    %162 = vector.extract_strided_slice %140 {offsets = [3, 0], sizes = [1, 256], strides = [1, 1]} : vector<8x256xf32> to vector<1x256xf32>
    %163 = vector.broadcast %161 : vector<8x1xf32> to vector<8x256xf32>
    %164 = vector.broadcast %162 : vector<1x256xf32> to vector<8x256xf32>
    %165 = arith.mulf %163, %164 : vector<8x256xf32>
    %166 = arith.addf %160, %165 : vector<8x256xf32>
    %c0_42 = arith.constant 0 : index
    %c129 = arith.constant 129 : index
    %167 = vector.load %arg6[%c0_42, %c129] : memref<8x512xf32, #tpu.memory_space<vmem>>, vector<8x256xf32>
    %c5 = arith.constant 5 : index
    %c0_43 = arith.constant 0 : index
    %168 = vector.load %arg2[%c5, %c0_43] : memref<9x256xf32, #tpu.memory_space<vmem>>, vector<1x256xf32>
    %cst_44 = arith.constant 0.000000e+00 : f32
    %169 = vector.broadcast %cst_44 : f32 to vector<1x256xf32>
    %170 = arith.cmpf ogt, %168, %169 : vector<1x256xf32>
    %cst_45 = arith.constant 0.000000e+00 : f32
    %171 = vector.shape_cast %170 : vector<1x256xi1> to vector<1x256xi1>
    %172 = vector.broadcast %171 : vector<1x256xi1> to vector<8x256xi1>
    %173 = vector.broadcast %cst_45 : f32 to vector<8x256xf32>
    %174 = arith.select %172, %167, %173 : vector<8x256xi1>, vector<8x256xf32>
    %c1_46 = arith.constant 1 : index
    %c2_47 = arith.constant 2 : index
    %c0_48 = arith.constant 0 : index
    %c0_49 = arith.constant 0 : index
    %175 = vector.load %arg3[%c1_46, %c2_47, %c0_48, %c0_49] : memref<3x3x8x8xf32, #tpu.memory_space<vmem>>, vector<1x1x8x8xf32>
    %176 = vector.shape_cast %175 : vector<1x1x8x8xf32> to vector<8x8xf32>
    %177 = vector.extract_strided_slice %176 {offsets = [0, 0], sizes = [8, 1], strides = [1, 1]} : vector<8x8xf32> to vector<8x1xf32>
    %178 = vector.extract_strided_slice %174 {offsets = [0, 0], sizes = [1, 256], strides = [1, 1]} : vector<8x256xf32> to vector<1x256xf32>
    %179 = vector.broadcast %177 : vector<8x1xf32> to vector<8x256xf32>
    %180 = vector.broadcast %178 : vector<1x256xf32> to vector<8x256xf32>
    %181 = arith.mulf %179, %180 : vector<8x256xf32>
    %182 = arith.addf %166, %181 : vector<8x256xf32>
    %183 = vector.extract_strided_slice %176 {offsets = [0, 1], sizes = [8, 1], strides = [1, 1]} : vector<8x8xf32> to vector<8x1xf32>
    %184 = vector.extract_strided_slice %174 {offsets = [1, 0], sizes = [1, 256], strides = [1, 1]} : vector<8x256xf32> to vector<1x256xf32>
    %185 = vector.broadcast %183 : vector<8x1xf32> to vector<8x256xf32>
    %186 = vector.broadcast %184 : vector<1x256xf32> to vector<8x256xf32>
    %187 = arith.mulf %185, %186 : vector<8x256xf32>
    %188 = arith.addf %182, %187 : vector<8x256xf32>
    %189 = vector.extract_strided_slice %176 {offsets = [0, 2], sizes = [8, 1], strides = [1, 1]} : vector<8x8xf32> to vector<8x1xf32>
    %190 = vector.extract_strided_slice %174 {offsets = [2, 0], sizes = [1, 256], strides = [1, 1]} : vector<8x256xf32> to vector<1x256xf32>
    %191 = vector.broadcast %189 : vector<8x1xf32> to vector<8x256xf32>
    %192 = vector.broadcast %190 : vector<1x256xf32> to vector<8x256xf32>
    %193 = arith.mulf %191, %192 : vector<8x256xf32>
    %194 = arith.addf %188, %193 : vector<8x256xf32>
    %195 = vector.extract_strided_slice %176 {offsets = [0, 3], sizes = [8, 1], strides = [1, 1]} : vector<8x8xf32> to vector<8x1xf32>
    %196 = vector.extract_strided_slice %174 {offsets = [3, 0], sizes = [1, 256], strides = [1, 1]} : vector<8x256xf32> to vector<1x256xf32>
    %197 = vector.broadcast %195 : vector<8x1xf32> to vector<8x256xf32>
    %198 = vector.broadcast %196 : vector<1x256xf32> to vector<8x256xf32>
    %199 = arith.mulf %197, %198 : vector<8x256xf32>
    %200 = arith.addf %194, %199 : vector<8x256xf32>
    %c0_50 = arith.constant 0 : index
    %c143 = arith.constant 143 : index
    %201 = vector.load %arg6[%c0_50, %c143] : memref<8x512xf32, #tpu.memory_space<vmem>>, vector<8x256xf32>
    %c6 = arith.constant 6 : index
    %c0_51 = arith.constant 0 : index
    %202 = vector.load %arg2[%c6, %c0_51] : memref<9x256xf32, #tpu.memory_space<vmem>>, vector<1x256xf32>
    %cst_52 = arith.constant 0.000000e+00 : f32
    %203 = vector.broadcast %cst_52 : f32 to vector<1x256xf32>
    %204 = arith.cmpf ogt, %202, %203 : vector<1x256xf32>
    %cst_53 = arith.constant 0.000000e+00 : f32
    %205 = vector.shape_cast %204 : vector<1x256xi1> to vector<1x256xi1>
    %206 = vector.broadcast %205 : vector<1x256xi1> to vector<8x256xi1>
    %207 = vector.broadcast %cst_53 : f32 to vector<8x256xf32>
    %208 = arith.select %206, %201, %207 : vector<8x256xi1>, vector<8x256xf32>
    %c2_54 = arith.constant 2 : index
    %c0_55 = arith.constant 0 : index
    %c0_56 = arith.constant 0 : index
    %c0_57 = arith.constant 0 : index
    %209 = vector.load %arg3[%c2_54, %c0_55, %c0_56, %c0_57] : memref<3x3x8x8xf32, #tpu.memory_space<vmem>>, vector<1x1x8x8xf32>
    %210 = vector.shape_cast %209 : vector<1x1x8x8xf32> to vector<8x8xf32>
    %211 = vector.extract_strided_slice %210 {offsets = [0, 0], sizes = [8, 1], strides = [1, 1]} : vector<8x8xf32> to vector<8x1xf32>
    %212 = vector.extract_strided_slice %208 {offsets = [0, 0], sizes = [1, 256], strides = [1, 1]} : vector<8x256xf32> to vector<1x256xf32>
    %213 = vector.broadcast %211 : vector<8x1xf32> to vector<8x256xf32>
    %214 = vector.broadcast %212 : vector<1x256xf32> to vector<8x256xf32>
    %215 = arith.mulf %213, %214 : vector<8x256xf32>
    %216 = arith.addf %200, %215 : vector<8x256xf32>
    %217 = vector.extract_strided_slice %210 {offsets = [0, 1], sizes = [8, 1], strides = [1, 1]} : vector<8x8xf32> to vector<8x1xf32>
    %218 = vector.extract_strided_slice %208 {offsets = [1, 0], sizes = [1, 256], strides = [1, 1]} : vector<8x256xf32> to vector<1x256xf32>
    %219 = vector.broadcast %217 : vector<8x1xf32> to vector<8x256xf32>
    %220 = vector.broadcast %218 : vector<1x256xf32> to vector<8x256xf32>
    %221 = arith.mulf %219, %220 : vector<8x256xf32>
    %222 = arith.addf %216, %221 : vector<8x256xf32>
    %223 = vector.extract_strided_slice %210 {offsets = [0, 2], sizes = [8, 1], strides = [1, 1]} : vector<8x8xf32> to vector<8x1xf32>
    %224 = vector.extract_strided_slice %208 {offsets = [2, 0], sizes = [1, 256], strides = [1, 1]} : vector<8x256xf32> to vector<1x256xf32>
    %225 = vector.broadcast %223 : vector<8x1xf32> to vector<8x256xf32>
    %226 = vector.broadcast %224 : vector<1x256xf32> to vector<8x256xf32>
    %227 = arith.mulf %225, %226 : vector<8x256xf32>
    %228 = arith.addf %222, %227 : vector<8x256xf32>
    %229 = vector.extract_strided_slice %210 {offsets = [0, 3], sizes = [8, 1], strides = [1, 1]} : vector<8x8xf32> to vector<8x1xf32>
    %230 = vector.extract_strided_slice %208 {offsets = [3, 0], sizes = [1, 256], strides = [1, 1]} : vector<8x256xf32> to vector<1x256xf32>
    %231 = vector.broadcast %229 : vector<8x1xf32> to vector<8x256xf32>
    %232 = vector.broadcast %230 : vector<1x256xf32> to vector<8x256xf32>
    %233 = arith.mulf %231, %232 : vector<8x256xf32>
    %234 = arith.addf %228, %233 : vector<8x256xf32>
    %c0_58 = arith.constant 0 : index
    %c144 = arith.constant 144 : index
    %235 = vector.load %arg6[%c0_58, %c144] : memref<8x512xf32, #tpu.memory_space<vmem>>, vector<8x256xf32>
    %c7 = arith.constant 7 : index
    %c0_59 = arith.constant 0 : index
    %236 = vector.load %arg2[%c7, %c0_59] : memref<9x256xf32, #tpu.memory_space<vmem>>, vector<1x256xf32>
    %cst_60 = arith.constant 0.000000e+00 : f32
    %237 = vector.broadcast %cst_60 : f32 to vector<1x256xf32>
    %238 = arith.cmpf ogt, %236, %237 : vector<1x256xf32>
    %cst_61 = arith.constant 0.000000e+00 : f32
    %239 = vector.shape_cast %238 : vector<1x256xi1> to vector<1x256xi1>
    %240 = vector.broadcast %239 : vector<1x256xi1> to vector<8x256xi1>
    %241 = vector.broadcast %cst_61 : f32 to vector<8x256xf32>
    %242 = arith.select %240, %235, %241 : vector<8x256xi1>, vector<8x256xf32>
    %c2_62 = arith.constant 2 : index
    %c1_63 = arith.constant 1 : index
    %c0_64 = arith.constant 0 : index
    %c0_65 = arith.constant 0 : index
    %243 = vector.load %arg3[%c2_62, %c1_63, %c0_64, %c0_65] : memref<3x3x8x8xf32, #tpu.memory_space<vmem>>, vector<1x1x8x8xf32>
    %244 = vector.shape_cast %243 : vector<1x1x8x8xf32> to vector<8x8xf32>
    %245 = vector.extract_strided_slice %244 {offsets = [0, 0], sizes = [8, 1], strides = [1, 1]} : vector<8x8xf32> to vector<8x1xf32>
    %246 = vector.extract_strided_slice %242 {offsets = [0, 0], sizes = [1, 256], strides = [1, 1]} : vector<8x256xf32> to vector<1x256xf32>
    %247 = vector.broadcast %245 : vector<8x1xf32> to vector<8x256xf32>
    %248 = vector.broadcast %246 : vector<1x256xf32> to vector<8x256xf32>
    %249 = arith.mulf %247, %248 : vector<8x256xf32>
    %250 = arith.addf %234, %249 : vector<8x256xf32>
    %251 = vector.extract_strided_slice %244 {offsets = [0, 1], sizes = [8, 1], strides = [1, 1]} : vector<8x8xf32> to vector<8x1xf32>
    %252 = vector.extract_strided_slice %242 {offsets = [1, 0], sizes = [1, 256], strides = [1, 1]} : vector<8x256xf32> to vector<1x256xf32>
    %253 = vector.broadcast %251 : vector<8x1xf32> to vector<8x256xf32>
    %254 = vector.broadcast %252 : vector<1x256xf32> to vector<8x256xf32>
    %255 = arith.mulf %253, %254 : vector<8x256xf32>
    %256 = arith.addf %250, %255 : vector<8x256xf32>
    %257 = vector.extract_strided_slice %244 {offsets = [0, 2], sizes = [8, 1], strides = [1, 1]} : vector<8x8xf32> to vector<8x1xf32>
    %258 = vector.extract_strided_slice %242 {offsets = [2, 0], sizes = [1, 256], strides = [1, 1]} : vector<8x256xf32> to vector<1x256xf32>
    %259 = vector.broadcast %257 : vector<8x1xf32> to vector<8x256xf32>
    %260 = vector.broadcast %258 : vector<1x256xf32> to vector<8x256xf32>
    %261 = arith.mulf %259, %260 : vector<8x256xf32>
    %262 = arith.addf %256, %261 : vector<8x256xf32>
    %263 = vector.extract_strided_slice %244 {offsets = [0, 3], sizes = [8, 1], strides = [1, 1]} : vector<8x8xf32> to vector<8x1xf32>
    %264 = vector.extract_strided_slice %242 {offsets = [3, 0], sizes = [1, 256], strides = [1, 1]} : vector<8x256xf32> to vector<1x256xf32>
    %265 = vector.broadcast %263 : vector<8x1xf32> to vector<8x256xf32>
    %266 = vector.broadcast %264 : vector<1x256xf32> to vector<8x256xf32>
    %267 = arith.mulf %265, %266 : vector<8x256xf32>
    %268 = arith.addf %262, %267 : vector<8x256xf32>
    %c0_66 = arith.constant 0 : index
    %c145 = arith.constant 145 : index
    %269 = vector.load %arg6[%c0_66, %c145] : memref<8x512xf32, #tpu.memory_space<vmem>>, vector<8x256xf32>
    %c8 = arith.constant 8 : index
    %c0_67 = arith.constant 0 : index
    %270 = vector.load %arg2[%c8, %c0_67] : memref<9x256xf32, #tpu.memory_space<vmem>>, vector<1x256xf32>
    %cst_68 = arith.constant 0.000000e+00 : f32
    %271 = vector.broadcast %cst_68 : f32 to vector<1x256xf32>
    %272 = arith.cmpf ogt, %270, %271 : vector<1x256xf32>
    %cst_69 = arith.constant 0.000000e+00 : f32
    %273 = vector.shape_cast %272 : vector<1x256xi1> to vector<1x256xi1>
    %274 = vector.broadcast %273 : vector<1x256xi1> to vector<8x256xi1>
    %275 = vector.broadcast %cst_69 : f32 to vector<8x256xf32>
    %276 = arith.select %274, %269, %275 : vector<8x256xi1>, vector<8x256xf32>
    %c2_70 = arith.constant 2 : index
    %c2_71 = arith.constant 2 : index
    %c0_72 = arith.constant 0 : index
    %c0_73 = arith.constant 0 : index
    %277 = vector.load %arg3[%c2_70, %c2_71, %c0_72, %c0_73] : memref<3x3x8x8xf32, #tpu.memory_space<vmem>>, vector<1x1x8x8xf32>
    %278 = vector.shape_cast %277 : vector<1x1x8x8xf32> to vector<8x8xf32>
    %279 = vector.extract_strided_slice %278 {offsets = [0, 0], sizes = [8, 1], strides = [1, 1]} : vector<8x8xf32> to vector<8x1xf32>
    %280 = vector.extract_strided_slice %276 {offsets = [0, 0], sizes = [1, 256], strides = [1, 1]} : vector<8x256xf32> to vector<1x256xf32>
    %281 = vector.broadcast %279 : vector<8x1xf32> to vector<8x256xf32>
    %282 = vector.broadcast %280 : vector<1x256xf32> to vector<8x256xf32>
    %283 = arith.mulf %281, %282 : vector<8x256xf32>
    %284 = arith.addf %268, %283 : vector<8x256xf32>
    %285 = vector.extract_strided_slice %278 {offsets = [0, 1], sizes = [8, 1], strides = [1, 1]} : vector<8x8xf32> to vector<8x1xf32>
    %286 = vector.extract_strided_slice %276 {offsets = [1, 0], sizes = [1, 256], strides = [1, 1]} : vector<8x256xf32> to vector<1x256xf32>
    %287 = vector.broadcast %285 : vector<8x1xf32> to vector<8x256xf32>
    %288 = vector.broadcast %286 : vector<1x256xf32> to vector<8x256xf32>
    %289 = arith.mulf %287, %288 : vector<8x256xf32>
    %290 = arith.addf %284, %289 : vector<8x256xf32>
    %291 = vector.extract_strided_slice %278 {offsets = [0, 2], sizes = [8, 1], strides = [1, 1]} : vector<8x8xf32> to vector<8x1xf32>
    %292 = vector.extract_strided_slice %276 {offsets = [2, 0], sizes = [1, 256], strides = [1, 1]} : vector<8x256xf32> to vector<1x256xf32>
    %293 = vector.broadcast %291 : vector<8x1xf32> to vector<8x256xf32>
    %294 = vector.broadcast %292 : vector<1x256xf32> to vector<8x256xf32>
    %295 = arith.mulf %293, %294 : vector<8x256xf32>
    %296 = arith.addf %290, %295 : vector<8x256xf32>
    %297 = vector.extract_strided_slice %278 {offsets = [0, 3], sizes = [8, 1], strides = [1, 1]} : vector<8x8xf32> to vector<8x1xf32>
    %298 = vector.extract_strided_slice %276 {offsets = [3, 0], sizes = [1, 256], strides = [1, 1]} : vector<8x256xf32> to vector<1x256xf32>
    %299 = vector.broadcast %297 : vector<8x1xf32> to vector<8x256xf32>
    %300 = vector.broadcast %298 : vector<1x256xf32> to vector<8x256xf32>
    %301 = arith.mulf %299, %300 : vector<8x256xf32>
    %302 = arith.addf %296, %301 : vector<8x256xf32>
    %cst_74 = arith.constant dense<0.000000e+00> : vector<8xf32>
    %303 = vector.multi_reduction <add>, %302, %cst_74 [1] : vector<8x256xf32> to vector<8xf32>
    %304 = vector.shape_cast %303 : vector<8xf32> to vector<8x1xf32>
    %cst_75 = arith.constant 3.906250e-03 : f32
    %305 = vector.broadcast %cst_75 : f32 to vector<8x1xf32>
    %306 = arith.mulf %304, %305 : vector<8x1xf32>
    %307 = arith.mulf %302, %302 : vector<8x256xf32>
    %cst_76 = arith.constant dense<0.000000e+00> : vector<8xf32>
    %308 = vector.multi_reduction <add>, %307, %cst_76 [1] : vector<8x256xf32> to vector<8xf32>
    %309 = vector.shape_cast %308 : vector<8xf32> to vector<8x1xf32>
    %cst_77 = arith.constant 3.906250e-03 : f32
    %310 = vector.broadcast %cst_77 : f32 to vector<8x1xf32>
    %311 = arith.mulf %309, %310 : vector<8x1xf32>
    %312 = arith.mulf %306, %306 : vector<8x1xf32>
    %313 = arith.subf %311, %312 : vector<8x1xf32>
    %cst_78 = arith.constant 0.000000e+00 : f32
    %314 = vector.broadcast %cst_78 : f32 to vector<8x1xf32>
    %315 = arith.maximumf %313, %314 : vector<8x1xf32>
    %316 = vector.broadcast %306 : vector<8x1xf32> to vector<8x256xf32>
    %317 = arith.subf %302, %316 : vector<8x256xf32>
    %cst_79 = arith.constant 9.99999974E-6 : f32
    %318 = vector.broadcast %cst_79 : f32 to vector<8x1xf32>
    %319 = arith.addf %315, %318 : vector<8x1xf32>
    %320 = math.rsqrt %319 : vector<8x1xf32>
    %321 = vector.broadcast %320 : vector<8x1xf32> to vector<8x256xf32>
    %322 = arith.mulf %317, %321 : vector<8x256xf32>
    %cst_80 = arith.constant 0.000000e+00 : f32
    %323 = vector.broadcast %cst_80 : f32 to vector<8x256xf32>
    %324 = arith.maximumf %322, %323 : vector<8x256xf32>
    %c0_81 = arith.constant 0 : index
    %c128_82 = arith.constant 128 : index
    %325 = vector.load %arg6[%c0_81, %c128_82] : memref<8x512xf32, #tpu.memory_space<vmem>>, vector<8x256xf32>
    tpu.vector_store %arg6[%c0_81, %c128_82], %324 {strides = array<i32>} : memref<8x512xf32, #tpu.memory_space<vmem>>, vector<8x256xf32>,
    %cst_83 = arith.constant 0.000000e+00 : f32
    %326 = vector.broadcast %cst_83 : f32 to vector<8x256xf32>
    %c0_84 = arith.constant 0 : index
    %c111_85 = arith.constant 111 : index
    %327 = vector.load %arg6[%c0_84, %c111_85] : memref<8x512xf32, #tpu.memory_space<vmem>>, vector<8x256xf32>
    %c0_86 = arith.constant 0 : index
    %c0_87 = arith.constant 0 : index
    %328 = vector.load %arg2[%c0_86, %c0_87] : memref<9x256xf32, #tpu.memory_space<vmem>>, vector<1x256xf32>
    %cst_88 = arith.constant 0.000000e+00 : f32
    %329 = vector.broadcast %cst_88 : f32 to vector<1x256xf32>
    %330 = arith.cmpf ogt, %328, %329 : vector<1x256xf32>
    %cst_89 = arith.constant 0.000000e+00 : f32
    %331 = vector.shape_cast %330 : vector<1x256xi1> to vector<1x256xi1>
    %332 = vector.broadcast %331 : vector<1x256xi1> to vector<8x256xi1>
    %333 = vector.broadcast %cst_89 : f32 to vector<8x256xf32>
    %334 = arith.select %332, %327, %333 : vector<8x256xi1>, vector<8x256xf32>
    %c0_90 = arith.constant 0 : index
    %c0_91 = arith.constant 0 : index
    %c0_92 = arith.constant 0 : index
    %c0_93 = arith.constant 0 : index
    %335 = vector.load %arg4[%c0_90, %c0_91, %c0_92, %c0_93] : memref<3x3x8x8xf32, #tpu.memory_space<vmem>>, vector<1x1x8x8xf32>
    %336 = vector.shape_cast %335 : vector<1x1x8x8xf32> to vector<8x8xf32>
    %337 = vector.extract_strided_slice %336 {offsets = [0, 0], sizes = [8, 1], strides = [1, 1]} : vector<8x8xf32> to vector<8x1xf32>
    %338 = vector.extract_strided_slice %334 {offsets = [0, 0], sizes = [1, 256], strides = [1, 1]} : vector<8x256xf32> to vector<1x256xf32>
    %339 = vector.broadcast %337 : vector<8x1xf32> to vector<8x256xf32>
    %340 = vector.broadcast %338 : vector<1x256xf32> to vector<8x256xf32>
    %341 = arith.mulf %339, %340 : vector<8x256xf32>
    %342 = arith.addf %326, %341 : vector<8x256xf32>
    %343 = vector.extract_strided_slice %336 {offsets = [0, 1], sizes = [8, 1], strides = [1, 1]} : vector<8x8xf32> to vector<8x1xf32>
    %344 = vector.extract_strided_slice %334 {offsets = [1, 0], sizes = [1, 256], strides = [1, 1]} : vector<8x256xf32> to vector<1x256xf32>
    %345 = vector.broadcast %343 : vector<8x1xf32> to vector<8x256xf32>
    %346 = vector.broadcast %344 : vector<1x256xf32> to vector<8x256xf32>
    %347 = arith.mulf %345, %346 : vector<8x256xf32>
    %348 = arith.addf %342, %347 : vector<8x256xf32>
    %349 = vector.extract_strided_slice %336 {offsets = [0, 2], sizes = [8, 1], strides = [1, 1]} : vector<8x8xf32> to vector<8x1xf32>
    %350 = vector.extract_strided_slice %334 {offsets = [2, 0], sizes = [1, 256], strides = [1, 1]} : vector<8x256xf32> to vector<1x256xf32>
    %351 = vector.broadcast %349 : vector<8x1xf32> to vector<8x256xf32>
    %352 = vector.broadcast %350 : vector<1x256xf32> to vector<8x256xf32>
    %353 = arith.mulf %351, %352 : vector<8x256xf32>
    %354 = arith.addf %348, %353 : vector<8x256xf32>
    %355 = vector.extract_strided_slice %336 {offsets = [0, 3], sizes = [8, 1], strides = [1, 1]} : vector<8x8xf32> to vector<8x1xf32>
    %356 = vector.extract_strided_slice %334 {offsets = [3, 0], sizes = [1, 256], strides = [1, 1]} : vector<8x256xf32> to vector<1x256xf32>
    %357 = vector.broadcast %355 : vector<8x1xf32> to vector<8x256xf32>
    %358 = vector.broadcast %356 : vector<1x256xf32> to vector<8x256xf32>
    %359 = arith.mulf %357, %358 : vector<8x256xf32>
    %360 = arith.addf %354, %359 : vector<8x256xf32>
    %c0_94 = arith.constant 0 : index
    %c112_95 = arith.constant 112 : index
    %361 = vector.load %arg6[%c0_94, %c112_95] : memref<8x512xf32, #tpu.memory_space<vmem>>, vector<8x256xf32>
    %c1_96 = arith.constant 1 : index
    %c0_97 = arith.constant 0 : index
    %362 = vector.load %arg2[%c1_96, %c0_97] : memref<9x256xf32, #tpu.memory_space<vmem>>, vector<1x256xf32>
    %cst_98 = arith.constant 0.000000e+00 : f32
    %363 = vector.broadcast %cst_98 : f32 to vector<1x256xf32>
    %364 = arith.cmpf ogt, %362, %363 : vector<1x256xf32>
    %cst_99 = arith.constant 0.000000e+00 : f32
    %365 = vector.shape_cast %364 : vector<1x256xi1> to vector<1x256xi1>
    %366 = vector.broadcast %365 : vector<1x256xi1> to vector<8x256xi1>
    %367 = vector.broadcast %cst_99 : f32 to vector<8x256xf32>
    %368 = arith.select %366, %361, %367 : vector<8x256xi1>, vector<8x256xf32>
    %c0_100 = arith.constant 0 : index
    %c1_101 = arith.constant 1 : index
    %c0_102 = arith.constant 0 : index
    %c0_103 = arith.constant 0 : index
    %369 = vector.load %arg4[%c0_100, %c1_101, %c0_102, %c0_103] : memref<3x3x8x8xf32, #tpu.memory_space<vmem>>, vector<1x1x8x8xf32>
    %370 = vector.shape_cast %369 : vector<1x1x8x8xf32> to vector<8x8xf32>
    %371 = vector.extract_strided_slice %370 {offsets = [0, 0], sizes = [8, 1], strides = [1, 1]} : vector<8x8xf32> to vector<8x1xf32>
    %372 = vector.extract_strided_slice %368 {offsets = [0, 0], sizes = [1, 256], strides = [1, 1]} : vector<8x256xf32> to vector<1x256xf32>
    %373 = vector.broadcast %371 : vector<8x1xf32> to vector<8x256xf32>
    %374 = vector.broadcast %372 : vector<1x256xf32> to vector<8x256xf32>
    %375 = arith.mulf %373, %374 : vector<8x256xf32>
    %376 = arith.addf %360, %375 : vector<8x256xf32>
    %377 = vector.extract_strided_slice %370 {offsets = [0, 1], sizes = [8, 1], strides = [1, 1]} : vector<8x8xf32> to vector<8x1xf32>
    %378 = vector.extract_strided_slice %368 {offsets = [1, 0], sizes = [1, 256], strides = [1, 1]} : vector<8x256xf32> to vector<1x256xf32>
    %379 = vector.broadcast %377 : vector<8x1xf32> to vector<8x256xf32>
    %380 = vector.broadcast %378 : vector<1x256xf32> to vector<8x256xf32>
    %381 = arith.mulf %379, %380 : vector<8x256xf32>
    %382 = arith.addf %376, %381 : vector<8x256xf32>
    %383 = vector.extract_strided_slice %370 {offsets = [0, 2], sizes = [8, 1], strides = [1, 1]} : vector<8x8xf32> to vector<8x1xf32>
    %384 = vector.extract_strided_slice %368 {offsets = [2, 0], sizes = [1, 256], strides = [1, 1]} : vector<8x256xf32> to vector<1x256xf32>
    %385 = vector.broadcast %383 : vector<8x1xf32> to vector<8x256xf32>
    %386 = vector.broadcast %384 : vector<1x256xf32> to vector<8x256xf32>
    %387 = arith.mulf %385, %386 : vector<8x256xf32>
    %388 = arith.addf %382, %387 : vector<8x256xf32>
    %389 = vector.extract_strided_slice %370 {offsets = [0, 3], sizes = [8, 1], strides = [1, 1]} : vector<8x8xf32> to vector<8x1xf32>
    %390 = vector.extract_strided_slice %368 {offsets = [3, 0], sizes = [1, 256], strides = [1, 1]} : vector<8x256xf32> to vector<1x256xf32>
    %391 = vector.broadcast %389 : vector<8x1xf32> to vector<8x256xf32>
    %392 = vector.broadcast %390 : vector<1x256xf32> to vector<8x256xf32>
    %393 = arith.mulf %391, %392 : vector<8x256xf32>
    %394 = arith.addf %388, %393 : vector<8x256xf32>
    %c0_104 = arith.constant 0 : index
    %c113_105 = arith.constant 113 : index
    %395 = vector.load %arg6[%c0_104, %c113_105] : memref<8x512xf32, #tpu.memory_space<vmem>>, vector<8x256xf32>
    %c2_106 = arith.constant 2 : index
    %c0_107 = arith.constant 0 : index
    %396 = vector.load %arg2[%c2_106, %c0_107] : memref<9x256xf32, #tpu.memory_space<vmem>>, vector<1x256xf32>
    %cst_108 = arith.constant 0.000000e+00 : f32
    %397 = vector.broadcast %cst_108 : f32 to vector<1x256xf32>
    %398 = arith.cmpf ogt, %396, %397 : vector<1x256xf32>
    %cst_109 = arith.constant 0.000000e+00 : f32
    %399 = vector.shape_cast %398 : vector<1x256xi1> to vector<1x256xi1>
    %400 = vector.broadcast %399 : vector<1x256xi1> to vector<8x256xi1>
    %401 = vector.broadcast %cst_109 : f32 to vector<8x256xf32>
    %402 = arith.select %400, %395, %401 : vector<8x256xi1>, vector<8x256xf32>
    %c0_110 = arith.constant 0 : index
    %c2_111 = arith.constant 2 : index
    %c0_112 = arith.constant 0 : index
    %c0_113 = arith.constant 0 : index
    %403 = vector.load %arg4[%c0_110, %c2_111, %c0_112, %c0_113] : memref<3x3x8x8xf32, #tpu.memory_space<vmem>>, vector<1x1x8x8xf32>
    %404 = vector.shape_cast %403 : vector<1x1x8x8xf32> to vector<8x8xf32>
    %405 = vector.extract_strided_slice %404 {offsets = [0, 0], sizes = [8, 1], strides = [1, 1]} : vector<8x8xf32> to vector<8x1xf32>
    %406 = vector.extract_strided_slice %402 {offsets = [0, 0], sizes = [1, 256], strides = [1, 1]} : vector<8x256xf32> to vector<1x256xf32>
    %407 = vector.broadcast %405 : vector<8x1xf32> to vector<8x256xf32>
    %408 = vector.broadcast %406 : vector<1x256xf32> to vector<8x256xf32>
    %409 = arith.mulf %407, %408 : vector<8x256xf32>
    %410 = arith.addf %394, %409 : vector<8x256xf32>
    %411 = vector.extract_strided_slice %404 {offsets = [0, 1], sizes = [8, 1], strides = [1, 1]} : vector<8x8xf32> to vector<8x1xf32>
    %412 = vector.extract_strided_slice %402 {offsets = [1, 0], sizes = [1, 256], strides = [1, 1]} : vector<8x256xf32> to vector<1x256xf32>
    %413 = vector.broadcast %411 : vector<8x1xf32> to vector<8x256xf32>
    %414 = vector.broadcast %412 : vector<1x256xf32> to vector<8x256xf32>
    %415 = arith.mulf %413, %414 : vector<8x256xf32>
    %416 = arith.addf %410, %415 : vector<8x256xf32>
    %417 = vector.extract_strided_slice %404 {offsets = [0, 2], sizes = [8, 1], strides = [1, 1]} : vector<8x8xf32> to vector<8x1xf32>
    %418 = vector.extract_strided_slice %402 {offsets = [2, 0], sizes = [1, 256], strides = [1, 1]} : vector<8x256xf32> to vector<1x256xf32>
    %419 = vector.broadcast %417 : vector<8x1xf32> to vector<8x256xf32>
    %420 = vector.broadcast %418 : vector<1x256xf32> to vector<8x256xf32>
    %421 = arith.mulf %419, %420 : vector<8x256xf32>
    %422 = arith.addf %416, %421 : vector<8x256xf32>
    %423 = vector.extract_strided_slice %404 {offsets = [0, 3], sizes = [8, 1], strides = [1, 1]} : vector<8x8xf32> to vector<8x1xf32>
    %424 = vector.extract_strided_slice %402 {offsets = [3, 0], sizes = [1, 256], strides = [1, 1]} : vector<8x256xf32> to vector<1x256xf32>
    %425 = vector.broadcast %423 : vector<8x1xf32> to vector<8x256xf32>
    %426 = vector.broadcast %424 : vector<1x256xf32> to vector<8x256xf32>
    %427 = arith.mulf %425, %426 : vector<8x256xf32>
    %428 = arith.addf %422, %427 : vector<8x256xf32>
    %c0_114 = arith.constant 0 : index
    %c127_115 = arith.constant 127 : index
    %429 = vector.load %arg6[%c0_114, %c127_115] : memref<8x512xf32, #tpu.memory_space<vmem>>, vector<8x256xf32>
    %c3_116 = arith.constant 3 : index
    %c0_117 = arith.constant 0 : index
    %430 = vector.load %arg2[%c3_116, %c0_117] : memref<9x256xf32, #tpu.memory_space<vmem>>, vector<1x256xf32>
    %cst_118 = arith.constant 0.000000e+00 : f32
    %431 = vector.broadcast %cst_118 : f32 to vector<1x256xf32>
    %432 = arith.cmpf ogt, %430, %431 : vector<1x256xf32>
    %cst_119 = arith.constant 0.000000e+00 : f32
    %433 = vector.shape_cast %432 : vector<1x256xi1> to vector<1x256xi1>
    %434 = vector.broadcast %433 : vector<1x256xi1> to vector<8x256xi1>
    %435 = vector.broadcast %cst_119 : f32 to vector<8x256xf32>
    %436 = arith.select %434, %429, %435 : vector<8x256xi1>, vector<8x256xf32>
    %c1_120 = arith.constant 1 : index
    %c0_121 = arith.constant 0 : index
    %c0_122 = arith.constant 0 : index
    %c0_123 = arith.constant 0 : index
    %437 = vector.load %arg4[%c1_120, %c0_121, %c0_122, %c0_123] : memref<3x3x8x8xf32, #tpu.memory_space<vmem>>, vector<1x1x8x8xf32>
    %438 = vector.shape_cast %437 : vector<1x1x8x8xf32> to vector<8x8xf32>
    %439 = vector.extract_strided_slice %438 {offsets = [0, 0], sizes = [8, 1], strides = [1, 1]} : vector<8x8xf32> to vector<8x1xf32>
    %440 = vector.extract_strided_slice %436 {offsets = [0, 0], sizes = [1, 256], strides = [1, 1]} : vector<8x256xf32> to vector<1x256xf32>
    %441 = vector.broadcast %439 : vector<8x1xf32> to vector<8x256xf32>
    %442 = vector.broadcast %440 : vector<1x256xf32> to vector<8x256xf32>
    %443 = arith.mulf %441, %442 : vector<8x256xf32>
    %444 = arith.addf %428, %443 : vector<8x256xf32>
    %445 = vector.extract_strided_slice %438 {offsets = [0, 1], sizes = [8, 1], strides = [1, 1]} : vector<8x8xf32> to vector<8x1xf32>
    %446 = vector.extract_strided_slice %436 {offsets = [1, 0], sizes = [1, 256], strides = [1, 1]} : vector<8x256xf32> to vector<1x256xf32>
    %447 = vector.broadcast %445 : vector<8x1xf32> to vector<8x256xf32>
    %448 = vector.broadcast %446 : vector<1x256xf32> to vector<8x256xf32>
    %449 = arith.mulf %447, %448 : vector<8x256xf32>
    %450 = arith.addf %444, %449 : vector<8x256xf32>
    %451 = vector.extract_strided_slice %438 {offsets = [0, 2], sizes = [8, 1], strides = [1, 1]} : vector<8x8xf32> to vector<8x1xf32>
    %452 = vector.extract_strided_slice %436 {offsets = [2, 0], sizes = [1, 256], strides = [1, 1]} : vector<8x256xf32> to vector<1x256xf32>
    %453 = vector.broadcast %451 : vector<8x1xf32> to vector<8x256xf32>
    %454 = vector.broadcast %452 : vector<1x256xf32> to vector<8x256xf32>
    %455 = arith.mulf %453, %454 : vector<8x256xf32>
    %456 = arith.addf %450, %455 : vector<8x256xf32>
    %457 = vector.extract_strided_slice %438 {offsets = [0, 3], sizes = [8, 1], strides = [1, 1]} : vector<8x8xf32> to vector<8x1xf32>
    %458 = vector.extract_strided_slice %436 {offsets = [3, 0], sizes = [1, 256], strides = [1, 1]} : vector<8x256xf32> to vector<1x256xf32>
    %459 = vector.broadcast %457 : vector<8x1xf32> to vector<8x256xf32>
    %460 = vector.broadcast %458 : vector<1x256xf32> to vector<8x256xf32>
    %461 = arith.mulf %459, %460 : vector<8x256xf32>
    %462 = arith.addf %456, %461 : vector<8x256xf32>
    %c0_124 = arith.constant 0 : index
    %c128_125 = arith.constant 128 : index
    %463 = vector.load %arg6[%c0_124, %c128_125] : memref<8x512xf32, #tpu.memory_space<vmem>>, vector<8x256xf32>
    %c1_126 = arith.constant 1 : index
    %c1_127 = arith.constant 1 : index
    %c0_128 = arith.constant 0 : index
    %c0_129 = arith.constant 0 : index
    %464 = vector.load %arg4[%c1_126, %c1_127, %c0_128, %c0_129] : memref<3x3x8x8xf32, #tpu.memory_space<vmem>>, vector<1x1x8x8xf32>
    %465 = vector.shape_cast %464 : vector<1x1x8x8xf32> to vector<8x8xf32>
    %466 = vector.extract_strided_slice %465 {offsets = [0, 0], sizes = [8, 1], strides = [1, 1]} : vector<8x8xf32> to vector<8x1xf32>
    %467 = vector.extract_strided_slice %463 {offsets = [0, 0], sizes = [1, 256], strides = [1, 1]} : vector<8x256xf32> to vector<1x256xf32>
    %468 = vector.broadcast %466 : vector<8x1xf32> to vector<8x256xf32>
    %469 = vector.broadcast %467 : vector<1x256xf32> to vector<8x256xf32>
    %470 = arith.mulf %468, %469 : vector<8x256xf32>
    %471 = arith.addf %462, %470 : vector<8x256xf32>
    %472 = vector.extract_strided_slice %465 {offsets = [0, 1], sizes = [8, 1], strides = [1, 1]} : vector<8x8xf32> to vector<8x1xf32>
    %473 = vector.extract_strided_slice %463 {offsets = [1, 0], sizes = [1, 256], strides = [1, 1]} : vector<8x256xf32> to vector<1x256xf32>
    %474 = vector.broadcast %472 : vector<8x1xf32> to vector<8x256xf32>
    %475 = vector.broadcast %473 : vector<1x256xf32> to vector<8x256xf32>
    %476 = arith.mulf %474, %475 : vector<8x256xf32>
    %477 = arith.addf %471, %476 : vector<8x256xf32>
    %478 = vector.extract_strided_slice %465 {offsets = [0, 2], sizes = [8, 1], strides = [1, 1]} : vector<8x8xf32> to vector<8x1xf32>
    %479 = vector.extract_strided_slice %463 {offsets = [2, 0], sizes = [1, 256], strides = [1, 1]} : vector<8x256xf32> to vector<1x256xf32>
    %480 = vector.broadcast %478 : vector<8x1xf32> to vector<8x256xf32>
    %481 = vector.broadcast %479 : vector<1x256xf32> to vector<8x256xf32>
    %482 = arith.mulf %480, %481 : vector<8x256xf32>
    %483 = arith.addf %477, %482 : vector<8x256xf32>
    %484 = vector.extract_strided_slice %465 {offsets = [0, 3], sizes = [8, 1], strides = [1, 1]} : vector<8x8xf32> to vector<8x1xf32>
    %485 = vector.extract_strided_slice %463 {offsets = [3, 0], sizes = [1, 256], strides = [1, 1]} : vector<8x256xf32> to vector<1x256xf32>
    %486 = vector.broadcast %484 : vector<8x1xf32> to vector<8x256xf32>
    %487 = vector.broadcast %485 : vector<1x256xf32> to vector<8x256xf32>
    %488 = arith.mulf %486, %487 : vector<8x256xf32>
    %489 = arith.addf %483, %488 : vector<8x256xf32>
    %c0_130 = arith.constant 0 : index
    %c129_131 = arith.constant 129 : index
    %490 = vector.load %arg6[%c0_130, %c129_131] : memref<8x512xf32, #tpu.memory_space<vmem>>, vector<8x256xf32>
    %c5_132 = arith.constant 5 : index
    %c0_133 = arith.constant 0 : index
    %491 = vector.load %arg2[%c5_132, %c0_133] : memref<9x256xf32, #tpu.memory_space<vmem>>, vector<1x256xf32>
    %cst_134 = arith.constant 0.000000e+00 : f32
    %492 = vector.broadcast %cst_134 : f32 to vector<1x256xf32>
    %493 = arith.cmpf ogt, %491, %492 : vector<1x256xf32>
    %cst_135 = arith.constant 0.000000e+00 : f32
    %494 = vector.shape_cast %493 : vector<1x256xi1> to vector<1x256xi1>
    %495 = vector.broadcast %494 : vector<1x256xi1> to vector<8x256xi1>
    %496 = vector.broadcast %cst_135 : f32 to vector<8x256xf32>
    %497 = arith.select %495, %490, %496 : vector<8x256xi1>, vector<8x256xf32>
    %c1_136 = arith.constant 1 : index
    %c2_137 = arith.constant 2 : index
    %c0_138 = arith.constant 0 : index
    %c0_139 = arith.constant 0 : index
    %498 = vector.load %arg4[%c1_136, %c2_137, %c0_138, %c0_139] : memref<3x3x8x8xf32, #tpu.memory_space<vmem>>, vector<1x1x8x8xf32>
    %499 = vector.shape_cast %498 : vector<1x1x8x8xf32> to vector<8x8xf32>
    %500 = vector.extract_strided_slice %499 {offsets = [0, 0], sizes = [8, 1], strides = [1, 1]} : vector<8x8xf32> to vector<8x1xf32>
    %501 = vector.extract_strided_slice %497 {offsets = [0, 0], sizes = [1, 256], strides = [1, 1]} : vector<8x256xf32> to vector<1x256xf32>
    %502 = vector.broadcast %500 : vector<8x1xf32> to vector<8x256xf32>
    %503 = vector.broadcast %501 : vector<1x256xf32> to vector<8x256xf32>
    %504 = arith.mulf %502, %503 : vector<8x256xf32>
    %505 = arith.addf %489, %504 : vector<8x256xf32>
    %506 = vector.extract_strided_slice %499 {offsets = [0, 1], sizes = [8, 1], strides = [1, 1]} : vector<8x8xf32> to vector<8x1xf32>
    %507 = vector.extract_strided_slice %497 {offsets = [1, 0], sizes = [1, 256], strides = [1, 1]} : vector<8x256xf32> to vector<1x256xf32>
    %508 = vector.broadcast %506 : vector<8x1xf32> to vector<8x256xf32>
    %509 = vector.broadcast %507 : vector<1x256xf32> to vector<8x256xf32>
    %510 = arith.mulf %508, %509 : vector<8x256xf32>
    %511 = arith.addf %505, %510 : vector<8x256xf32>
    %512 = vector.extract_strided_slice %499 {offsets = [0, 2], sizes = [8, 1], strides = [1, 1]} : vector<8x8xf32> to vector<8x1xf32>
    %513 = vector.extract_strided_slice %497 {offsets = [2, 0], sizes = [1, 256], strides = [1, 1]} : vector<8x256xf32> to vector<1x256xf32>
    %514 = vector.broadcast %512 : vector<8x1xf32> to vector<8x256xf32>
    %515 = vector.broadcast %513 : vector<1x256xf32> to vector<8x256xf32>
    %516 = arith.mulf %514, %515 : vector<8x256xf32>
    %517 = arith.addf %511, %516 : vector<8x256xf32>
    %518 = vector.extract_strided_slice %499 {offsets = [0, 3], sizes = [8, 1], strides = [1, 1]} : vector<8x8xf32> to vector<8x1xf32>
    %519 = vector.extract_strided_slice %497 {offsets = [3, 0], sizes = [1, 256], strides = [1, 1]} : vector<8x256xf32> to vector<1x256xf32>
    %520 = vector.broadcast %518 : vector<8x1xf32> to vector<8x256xf32>
    %521 = vector.broadcast %519 : vector<1x256xf32> to vector<8x256xf32>
    %522 = arith.mulf %520, %521 : vector<8x256xf32>
    %523 = arith.addf %517, %522 : vector<8x256xf32>
    %c0_140 = arith.constant 0 : index
    %c143_141 = arith.constant 143 : index
    %524 = vector.load %arg6[%c0_140, %c143_141] : memref<8x512xf32, #tpu.memory_space<vmem>>, vector<8x256xf32>
    %c6_142 = arith.constant 6 : index
    %c0_143 = arith.constant 0 : index
    %525 = vector.load %arg2[%c6_142, %c0_143] : memref<9x256xf32, #tpu.memory_space<vmem>>, vector<1x256xf32>
    %cst_144 = arith.constant 0.000000e+00 : f32
    %526 = vector.broadcast %cst_144 : f32 to vector<1x256xf32>
    %527 = arith.cmpf ogt, %525, %526 : vector<1x256xf32>
    %cst_145 = arith.constant 0.000000e+00 : f32
    %528 = vector.shape_cast %527 : vector<1x256xi1> to vector<1x256xi1>
    %529 = vector.broadcast %528 : vector<1x256xi1> to vector<8x256xi1>
    %530 = vector.broadcast %cst_145 : f32 to vector<8x256xf32>
    %531 = arith.select %529, %524, %530 : vector<8x256xi1>, vector<8x256xf32>
    %c2_146 = arith.constant 2 : index
    %c0_147 = arith.constant 0 : index
    %c0_148 = arith.constant 0 : index
    %c0_149 = arith.constant 0 : index
    %532 = vector.load %arg4[%c2_146, %c0_147, %c0_148, %c0_149] : memref<3x3x8x8xf32, #tpu.memory_space<vmem>>, vector<1x1x8x8xf32>
    %533 = vector.shape_cast %532 : vector<1x1x8x8xf32> to vector<8x8xf32>
    %534 = vector.extract_strided_slice %533 {offsets = [0, 0], sizes = [8, 1], strides = [1, 1]} : vector<8x8xf32> to vector<8x1xf32>
    %535 = vector.extract_strided_slice %531 {offsets = [0, 0], sizes = [1, 256], strides = [1, 1]} : vector<8x256xf32> to vector<1x256xf32>
    %536 = vector.broadcast %534 : vector<8x1xf32> to vector<8x256xf32>
    %537 = vector.broadcast %535 : vector<1x256xf32> to vector<8x256xf32>
    %538 = arith.mulf %536, %537 : vector<8x256xf32>
    %539 = arith.addf %523, %538 : vector<8x256xf32>
    %540 = vector.extract_strided_slice %533 {offsets = [0, 1], sizes = [8, 1], strides = [1, 1]} : vector<8x8xf32> to vector<8x1xf32>
    %541 = vector.extract_strided_slice %531 {offsets = [1, 0], sizes = [1, 256], strides = [1, 1]} : vector<8x256xf32> to vector<1x256xf32>
    %542 = vector.broadcast %540 : vector<8x1xf32> to vector<8x256xf32>
    %543 = vector.broadcast %541 : vector<1x256xf32> to vector<8x256xf32>
    %544 = arith.mulf %542, %543 : vector<8x256xf32>
    %545 = arith.addf %539, %544 : vector<8x256xf32>
    %546 = vector.extract_strided_slice %533 {offsets = [0, 2], sizes = [8, 1], strides = [1, 1]} : vector<8x8xf32> to vector<8x1xf32>
    %547 = vector.extract_strided_slice %531 {offsets = [2, 0], sizes = [1, 256], strides = [1, 1]} : vector<8x256xf32> to vector<1x256xf32>
    %548 = vector.broadcast %546 : vector<8x1xf32> to vector<8x256xf32>
    %549 = vector.broadcast %547 : vector<1x256xf32> to vector<8x256xf32>
    %550 = arith.mulf %548, %549 : vector<8x256xf32>
    %551 = arith.addf %545, %550 : vector<8x256xf32>
    %552 = vector.extract_strided_slice %533 {offsets = [0, 3], sizes = [8, 1], strides = [1, 1]} : vector<8x8xf32> to vector<8x1xf32>
    %553 = vector.extract_strided_slice %531 {offsets = [3, 0], sizes = [1, 256], strides = [1, 1]} : vector<8x256xf32> to vector<1x256xf32>
    %554 = vector.broadcast %552 : vector<8x1xf32> to vector<8x256xf32>
    %555 = vector.broadcast %553 : vector<1x256xf32> to vector<8x256xf32>
    %556 = arith.mulf %554, %555 : vector<8x256xf32>
    %557 = arith.addf %551, %556 : vector<8x256xf32>
    %c0_150 = arith.constant 0 : index
    %c144_151 = arith.constant 144 : index
    %558 = vector.load %arg6[%c0_150, %c144_151] : memref<8x512xf32, #tpu.memory_space<vmem>>, vector<8x256xf32>
    %c7_152 = arith.constant 7 : index
    %c0_153 = arith.constant 0 : index
    %559 = vector.load %arg2[%c7_152, %c0_153] : memref<9x256xf32, #tpu.memory_space<vmem>>, vector<1x256xf32>
    %cst_154 = arith.constant 0.000000e+00 : f32
    %560 = vector.broadcast %cst_154 : f32 to vector<1x256xf32>
    %561 = arith.cmpf ogt, %559, %560 : vector<1x256xf32>
    %cst_155 = arith.constant 0.000000e+00 : f32
    %562 = vector.shape_cast %561 : vector<1x256xi1> to vector<1x256xi1>
    %563 = vector.broadcast %562 : vector<1x256xi1> to vector<8x256xi1>
    %564 = vector.broadcast %cst_155 : f32 to vector<8x256xf32>
    %565 = arith.select %563, %558, %564 : vector<8x256xi1>, vector<8x256xf32>
    %c2_156 = arith.constant 2 : index
    %c1_157 = arith.constant 1 : index
    %c0_158 = arith.constant 0 : index
    %c0_159 = arith.constant 0 : index
    %566 = vector.load %arg4[%c2_156, %c1_157, %c0_158, %c0_159] : memref<3x3x8x8xf32, #tpu.memory_space<vmem>>, vector<1x1x8x8xf32>
    %567 = vector.shape_cast %566 : vector<1x1x8x8xf32> to vector<8x8xf32>
    %568 = vector.extract_strided_slice %567 {offsets = [0, 0], sizes = [8, 1], strides = [1, 1]} : vector<8x8xf32> to vector<8x1xf32>
    %569 = vector.extract_strided_slice %565 {offsets = [0, 0], sizes = [1, 256], strides = [1, 1]} : vector<8x256xf32> to vector<1x256xf32>
    %570 = vector.broadcast %568 : vector<8x1xf32> to vector<8x256xf32>
    %571 = vector.broadcast %569 : vector<1x256xf32> to vector<8x256xf32>
    %572 = arith.mulf %570, %571 : vector<8x256xf32>
    %573 = arith.addf %557, %572 : vector<8x256xf32>
    %574 = vector.extract_strided_slice %567 {offsets = [0, 1], sizes = [8, 1], strides = [1, 1]} : vector<8x8xf32> to vector<8x1xf32>
    %575 = vector.extract_strided_slice %565 {offsets = [1, 0], sizes = [1, 256], strides = [1, 1]} : vector<8x256xf32> to vector<1x256xf32>
    %576 = vector.broadcast %574 : vector<8x1xf32> to vector<8x256xf32>
    %577 = vector.broadcast %575 : vector<1x256xf32> to vector<8x256xf32>
    %578 = arith.mulf %576, %577 : vector<8x256xf32>
    %579 = arith.addf %573, %578 : vector<8x256xf32>
    %580 = vector.extract_strided_slice %567 {offsets = [0, 2], sizes = [8, 1], strides = [1, 1]} : vector<8x8xf32> to vector<8x1xf32>
    %581 = vector.extract_strided_slice %565 {offsets = [2, 0], sizes = [1, 256], strides = [1, 1]} : vector<8x256xf32> to vector<1x256xf32>
    %582 = vector.broadcast %580 : vector<8x1xf32> to vector<8x256xf32>
    %583 = vector.broadcast %581 : vector<1x256xf32> to vector<8x256xf32>
    %584 = arith.mulf %582, %583 : vector<8x256xf32>
    %585 = arith.addf %579, %584 : vector<8x256xf32>
    %586 = vector.extract_strided_slice %567 {offsets = [0, 3], sizes = [8, 1], strides = [1, 1]} : vector<8x8xf32> to vector<8x1xf32>
    %587 = vector.extract_strided_slice %565 {offsets = [3, 0], sizes = [1, 256], strides = [1, 1]} : vector<8x256xf32> to vector<1x256xf32>
    %588 = vector.broadcast %586 : vector<8x1xf32> to vector<8x256xf32>
    %589 = vector.broadcast %587 : vector<1x256xf32> to vector<8x256xf32>
    %590 = arith.mulf %588, %589 : vector<8x256xf32>
    %591 = arith.addf %585, %590 : vector<8x256xf32>
    %c0_160 = arith.constant 0 : index
    %c145_161 = arith.constant 145 : index
    %592 = vector.load %arg6[%c0_160, %c145_161] : memref<8x512xf32, #tpu.memory_space<vmem>>, vector<8x256xf32>
    %c8_162 = arith.constant 8 : index
    %c0_163 = arith.constant 0 : index
    %593 = vector.load %arg2[%c8_162, %c0_163] : memref<9x256xf32, #tpu.memory_space<vmem>>, vector<1x256xf32>
    %cst_164 = arith.constant 0.000000e+00 : f32
    %594 = vector.broadcast %cst_164 : f32 to vector<1x256xf32>
    %595 = arith.cmpf ogt, %593, %594 : vector<1x256xf32>
    %cst_165 = arith.constant 0.000000e+00 : f32
    %596 = vector.shape_cast %595 : vector<1x256xi1> to vector<1x256xi1>
    %597 = vector.broadcast %596 : vector<1x256xi1> to vector<8x256xi1>
    %598 = vector.broadcast %cst_165 : f32 to vector<8x256xf32>
    %599 = arith.select %597, %592, %598 : vector<8x256xi1>, vector<8x256xf32>
    %c2_166 = arith.constant 2 : index
    %c2_167 = arith.constant 2 : index
    %c0_168 = arith.constant 0 : index
    %c0_169 = arith.constant 0 : index
    %600 = vector.load %arg4[%c2_166, %c2_167, %c0_168, %c0_169] : memref<3x3x8x8xf32, #tpu.memory_space<vmem>>, vector<1x1x8x8xf32>
    %601 = vector.shape_cast %600 : vector<1x1x8x8xf32> to vector<8x8xf32>
    %602 = vector.extract_strided_slice %601 {offsets = [0, 0], sizes = [8, 1], strides = [1, 1]} : vector<8x8xf32> to vector<8x1xf32>
    %603 = vector.extract_strided_slice %599 {offsets = [0, 0], sizes = [1, 256], strides = [1, 1]} : vector<8x256xf32> to vector<1x256xf32>
    %604 = vector.broadcast %602 : vector<8x1xf32> to vector<8x256xf32>
    %605 = vector.broadcast %603 : vector<1x256xf32> to vector<8x256xf32>
    %606 = arith.mulf %604, %605 : vector<8x256xf32>
    %607 = arith.addf %591, %606 : vector<8x256xf32>
    %608 = vector.extract_strided_slice %601 {offsets = [0, 1], sizes = [8, 1], strides = [1, 1]} : vector<8x8xf32> to vector<8x1xf32>
    %609 = vector.extract_strided_slice %599 {offsets = [1, 0], sizes = [1, 256], strides = [1, 1]} : vector<8x256xf32> to vector<1x256xf32>
    %610 = vector.broadcast %608 : vector<8x1xf32> to vector<8x256xf32>
    %611 = vector.broadcast %609 : vector<1x256xf32> to vector<8x256xf32>
    %612 = arith.mulf %610, %611 : vector<8x256xf32>
    %613 = arith.addf %607, %612 : vector<8x256xf32>
    %614 = vector.extract_strided_slice %601 {offsets = [0, 2], sizes = [8, 1], strides = [1, 1]} : vector<8x8xf32> to vector<8x1xf32>
    %615 = vector.extract_strided_slice %599 {offsets = [2, 0], sizes = [1, 256], strides = [1, 1]} : vector<8x256xf32> to vector<1x256xf32>
    %616 = vector.broadcast %614 : vector<8x1xf32> to vector<8x256xf32>
    %617 = vector.broadcast %615 : vector<1x256xf32> to vector<8x256xf32>
    %618 = arith.mulf %616, %617 : vector<8x256xf32>
    %619 = arith.addf %613, %618 : vector<8x256xf32>
    %620 = vector.extract_strided_slice %601 {offsets = [0, 3], sizes = [8, 1], strides = [1, 1]} : vector<8x8xf32> to vector<8x1xf32>
    %621 = vector.extract_strided_slice %599 {offsets = [3, 0], sizes = [1, 256], strides = [1, 1]} : vector<8x256xf32> to vector<1x256xf32>
    %622 = vector.broadcast %620 : vector<8x1xf32> to vector<8x256xf32>
    %623 = vector.broadcast %621 : vector<1x256xf32> to vector<8x256xf32>
    %624 = arith.mulf %622, %623 : vector<8x256xf32>
    %625 = arith.addf %619, %624 : vector<8x256xf32>
    %cst_170 = arith.constant dense<0.000000e+00> : vector<8xf32>
    %626 = vector.multi_reduction <add>, %625, %cst_170 [1] : vector<8x256xf32> to vector<8xf32>
    %627 = vector.shape_cast %626 : vector<8xf32> to vector<8x1xf32>
    %cst_171 = arith.constant 3.906250e-03 : f32
    %628 = vector.broadcast %cst_171 : f32 to vector<8x1xf32>
    %629 = arith.mulf %627, %628 : vector<8x1xf32>
    %630 = arith.mulf %625, %625 : vector<8x256xf32>
    %cst_172 = arith.constant dense<0.000000e+00> : vector<8xf32>
    %631 = vector.multi_reduction <add>, %630, %cst_172 [1] : vector<8x256xf32> to vector<8xf32>
    %632 = vector.shape_cast %631 : vector<8xf32> to vector<8x1xf32>
    %cst_173 = arith.constant 3.906250e-03 : f32
    %633 = vector.broadcast %cst_173 : f32 to vector<8x1xf32>
    %634 = arith.mulf %632, %633 : vector<8x1xf32>
    %635 = arith.mulf %629, %629 : vector<8x1xf32>
    %636 = arith.subf %634, %635 : vector<8x1xf32>
    %cst_174 = arith.constant 0.000000e+00 : f32
    %637 = vector.broadcast %cst_174 : f32 to vector<8x1xf32>
    %638 = arith.maximumf %636, %637 : vector<8x1xf32>
    %639 = vector.broadcast %629 : vector<8x1xf32> to vector<8x256xf32>
    %640 = arith.subf %625, %639 : vector<8x256xf32>
    %cst_175 = arith.constant 9.99999974E-6 : f32
    %641 = vector.broadcast %cst_175 : f32 to vector<8x1xf32>
    %642 = arith.addf %638, %641 : vector<8x1xf32>
    %643 = math.rsqrt %642 : vector<8x1xf32>
    %644 = vector.broadcast %643 : vector<8x1xf32> to vector<8x256xf32>
    %645 = arith.mulf %640, %644 : vector<8x256xf32>
    %c0_176 = arith.constant 0 : index
    %c0_177 = arith.constant 0 : index
    %c0_178 = arith.constant 0 : index
    %646 = vector.load %arg1[%c0_176, %c0_177, %c0_178] : memref<1x8x256xf32, #tpu.memory_space<vmem>>, vector<1x8x256xf32>
    %647 = vector.shape_cast %646 : vector<1x8x256xf32> to vector<8x256xf32>
    %648 = arith.addf %647, %645 : vector<8x256xf32>
    %c0_179 = arith.constant 0 : index
    %c0_180 = arith.constant 0 : index
    %c0_181 = arith.constant 0 : index
    %649 = vector.load %arg5[%c0_179, %c0_180, %c0_181] : memref<1x8x256xf32, #tpu.memory_space<vmem>>, vector<1x8x256xf32>
    %650 = vector.shape_cast %649 : vector<1x8x256xf32> to vector<8x256xf32>
    %651 = vector.shape_cast %648 : vector<8x256xf32> to vector<1x8x256xf32>
    tpu.vector_store %arg5[%c0_179, %c0_180, %c0_181], %651 {strides = array<i32>} : memref<1x8x256xf32, #tpu.memory_space<vmem>>, vector<1x8x256xf32>,
    return
  }
  func.func @transform_0(%arg0: i32) -> (i32, i32, i32) {
    %c0_i32 = arith.constant 0 : i32
    %c0_i32_0 = arith.constant 0 : i32
    %c0_i32_1 = arith.constant 0 : i32
    return %arg0, %c0_i32, %c0_i32_0 : i32, i32, i32
  }
  func.func @transform_1(%arg0: i32) -> (i32, i32) {
    %c0_i32 = arith.constant 0 : i32
    %c0_i32_0 = arith.constant 0 : i32
    %c0_i32_1 = arith.constant 0 : i32
    return %c0_i32, %c0_i32_0 : i32, i32
  }
  func.func @transform_2(%arg0: i32) -> (i32, i32, i32, i32) {
    %c0_i32 = arith.constant 0 : i32
    %c0_i32_0 = arith.constant 0 : i32
    %c0_i32_1 = arith.constant 0 : i32
    %c0_i32_2 = arith.constant 0 : i32
    %c0_i32_3 = arith.constant 0 : i32
    return %c0_i32, %c0_i32_0, %c0_i32_1, %c0_i32_2 : i32, i32, i32, i32
  }
  func.func @transform_3(%arg0: i32) -> (i32, i32, i32, i32) {
    %c0_i32 = arith.constant 0 : i32
    %c0_i32_0 = arith.constant 0 : i32
    %c0_i32_1 = arith.constant 0 : i32
    %c0_i32_2 = arith.constant 0 : i32
    %c0_i32_3 = arith.constant 0 : i32
    return %c0_i32, %c0_i32_0, %c0_i32_1, %c0_i32_2 : i32, i32, i32, i32
  }
  func.func @transform_4(%arg0: i32) -> (i32, i32, i32) {
    %c0_i32 = arith.constant 0 : i32
    %c0_i32_0 = arith.constant 0 : i32
    %c0_i32_1 = arith.constant 0 : i32
    return %arg0, %c0_i32, %c0_i32_0 : i32, i32, i32
  }
}

</mosaic_0001>

<llo_original>
// kernel: resblock_pallas.1
$region0: #{resblock_pallas.1}
  #allocation0 [shape = 'u32[]', space=smem, size = 0x4, offset = 0x4, fixed_abs, tag = 'smem constant byte address 0x4 - core index']
  #allocation1 [shape = 'u32[144,128]{1,0:T(1,128)}', space=vmem, size = 0x12000, scoped, tag = 'internal scratch']
  #allocation2 [shape = 'f32[8,512]{1,0:T(8,128)}', space=vmem, size = 0x4000, scoped, tag = 'scratch operand']
  %s0 = inlined_call_operand.vmem [shape: f32[2,8,256], index: 0, kind: input, shape index: {}]
  %s1 = inlined_call_operand.vmem [shape: f32[9,256], index: 1, kind: input, shape index: {}]
  %s2 = inlined_call_operand.vmem [shape: f32[3,3,8,8], index: 2, kind: input, shape index: {}]
  %s3 = inlined_call_operand.vmem [shape: f32[3,3,8,8], index: 3, kind: input, shape index: {}]
  %s4 = inlined_call_operand.vmem [shape: f32[2,8,256], index: 4, kind: output, shape index: {}]
  %s5 = sld [smem:[#allocation0]]
  $region49: #{resblock_pallas.1} parent=0
    _
  %s7 = ssub.s32 1, %s5
  %s8 = scalar_select 0, %s7, %s5
  loop: start=0, step=1, limit=4
  $region2: #{resblock_pallas.1} parent=0 // loop_pre_header
    _
  $region3: #{resblock_pallas.1} parent=0 // loop_header
    %s10 = sphi 0, %s14
    %p11 = scmp.ge.s32.totalorder %s10, 4
    %s20 = sphi 0, %s22
    %s23 = sphi 0, %s20
    %s24 = sphi 0, %s23
    %s40 = sphi 0, %s24
    %s44 = sphi 0, %s44
    %s46 = sphi 0, %s44
    %s47 = sphi 0, %s46
    %s61 = sphi 0, %s47
    %s65 = sphi 0, %s65
    %s67 = sphi 0, %s65
    %s68 = sphi 0, %s67
    %s82 = sphi 0, %s68
    %s86 = sphi 0, %s86
    %s88 = sphi 0, %s86
    %s89 = sphi 0, %s88
    %s103 = sphi 0, %s89
    %s109 = sphi 0, %s111
    %s112 = sphi 0, %s109
    %s113 = sphi 0, %s112
    %s129 = sphi 0, %s113
  $region4: #{resblock_pallas.1} parent=0 // loop_header_branch
    %13 = sbr.rel (%p11) target = $region8
  $region5: #{resblock_pallas.1} parent=0 // loop_body
    %s15 = ssub.s32 %s10, 1
    %s16 = ssub.s32 %s10, 2
    %s17 = sadd.s32 %s10, 1
    %s18 = ssub.s32 %s10, %s17
    %p19 = scmp.eq.s32.totalorder %s18, 0
    %s21 = sadd.s32 %s20, 1
    %s22 = scalar_select %p19, %s20, %s21
    %p25 = pneg %p19
    %p26 = scmp.eq.s32.totalorder %s10, 1
    %p27 = por %p25, %p26
    %p28 = scmp.ne.s32.totalorder %s20, %s23
    %p29 = scmp.eq.s32.totalorder %s10, 0
    %p30 = por %p28, %p29
    %p31 = scmp.ne.s32.totalorder %s20, %s23
    %p32 = scmp.eq.s32.totalorder %s15, 1
    %p33 = por %p31, %p32
    %p34 = scmp.ne.s32.totalorder %s23, %s24
    %p35 = scmp.eq.s32.totalorder %s15, 0
    %p36 = por %p34, %p35
    %p37 = scmp.ne.s32.totalorder %s23, %s24
    %p38 = scmp.eq.s32.totalorder %s16, 1
    %p39 = por %p37, %p38
    %p41 = scmp.ne.s32.totalorder %s24, %s40
    %p42 = scmp.eq.s32.totalorder %s16, 0
    %p43 = por %p41, %p42
    %s45 = sadd.s32 %s44, 1
    %p48 = scmp.eq.s32.totalorder %s10, 1
    %p49 = scmp.ne.s32.totalorder %s44, %s46
    %p50 = scmp.eq.s32.totalorder %s10, 0
    %p51 = por %p49, %p50
    %p52 = scmp.ne.s32.totalorder %s44, %s46
    %p53 = scmp.eq.s32.totalorder %s15, 1
    %p54 = por %p52, %p53
    %p55 = scmp.ne.s32.totalorder %s46, %s47
    %p56 = scmp.eq.s32.totalorder %s15, 0
    %p57 = por %p55, %p56
    %p58 = scmp.ne.s32.totalorder %s46, %s47
    %p59 = scmp.eq.s32.totalorder %s16, 1
    %p60 = por %p58, %p59
    %p62 = scmp.ne.s32.totalorder %s47, %s61
    %p63 = scmp.eq.s32.totalorder %s16, 0
    %p64 = por %p62, %p63
    %s66 = sadd.s32 %s65, 1
    %p69 = scmp.eq.s32.totalorder %s10, 1
    %p70 = scmp.ne.s32.totalorder %s65, %s67
    %p71 = scmp.eq.s32.totalorder %s10, 0
    %p72 = por %p70, %p71
    %p73 = scmp.ne.s32.totalorder %s65, %s67
    %p74 = scmp.eq.s32.totalorder %s15, 1
    %p75 = por %p73, %p74
    %p76 = scmp.ne.s32.totalorder %s67, %s68
    %p77 = scmp.eq.s32.totalorder %s15, 0
    %p78 = por %p76, %p77
    %p79 = scmp.ne.s32.totalorder %s67, %s68
    %p80 = scmp.eq.s32.totalorder %s16, 1
    %p81 = por %p79, %p80
    %p83 = scmp.ne.s32.totalorder %s68, %s82
    %p84 = scmp.eq.s32.totalorder %s16, 0
    %p85 = por %p83, %p84
    %s87 = sadd.s32 %s86, 1
    %p90 = scmp.eq.s32.totalorder %s10, 1
    %p91 = scmp.ne.s32.totalorder %s86, %s88
    %p92 = scmp.eq.s32.totalorder %s10, 0
    %p93 = por %p91, %p92
    %p94 = scmp.ne.s32.totalorder %s86, %s88
    %p95 = scmp.eq.s32.totalorder %s15, 1
    %p96 = por %p94, %p95
    %p97 = scmp.ne.s32.totalorder %s88, %s89
    %p98 = scmp.eq.s32.totalorder %s15, 0
    %p99 = por %p97, %p98
    %p100 = scmp.ne.s32.totalorder %s88, %s89
    %p101 = scmp.eq.s32.totalorder %s16, 1
    %p102 = por %p100, %p101
    %p104 = scmp.ne.s32.totalorder %s89, %s103
    %p105 = scmp.eq.s32.totalorder %s16, 0
    %p106 = por %p104, %p105
    %s107 = ssub.s32 %s10, %s17
    %p108 = scmp.eq.s32.totalorder %s107, 0
    %s110 = sadd.s32 %s109, 1
    %s111 = scalar_select %p108, %s109, %s110
    %p114 = pneg %p108
    %p115 = scmp.eq.s32.totalorder %s10, 1
    %p116 = por %p114, %p115
    %p117 = scmp.ne.s32.totalorder %s109, %s112
    %p118 = scmp.eq.s32.totalorder %s10, 0
    %p119 = por %p117, %p118
    %p120 = scmp.ne.s32.totalorder %s109, %s112
    %p121 = scmp.eq.s32.totalorder %s15, 1
    %p122 = por %p120, %p121
    %p123 = scmp.ne.s32.totalorder %s112, %s113
    %p124 = scmp.eq.s32.totalorder %s15, 0
    %p125 = por %p123, %p124
    %p126 = scmp.ne.s32.totalorder %s112, %s113
    %p127 = scmp.eq.s32.totalorder %s16, 1
    %p128 = por %p126, %p127
    %p130 = scmp.ne.s32.totalorder %s113, %s129
    %p131 = scmp.eq.s32.totalorder %s16, 0
    %p132 = por %p130, %p131
    %p133 = scmp.le.s32.totalorder 1, %s10
    %p134 = scmp.lt.s32.totalorder %s10, 3
    %p135 = pnand %p133, %p134
    %p136 = pneg %p135
    // Predicated region
    $region9: #{resblock_pallas.1} parent=5 // pred_check
      _
    $region10: #{resblock_pallas.1} parent=5 // pred_check_branch
      %138 = sbr.rel (%p135) target = $region12
    $region11: #{resblock_pallas.1} parent=5 // pred_region
      %s139 = ssub.s32 %s10, 1
      // Predicated region
      $region13: #{resblock_pallas.1} parent=11 // pred_check
        %p140 = pneg %p57
      $region14: #{resblock_pallas.1} parent=11 // pred_check_branch
        %142 = sbr.rel (%p140) target = $region16
      $region15: #{resblock_pallas.1} parent=11 // pred_region
        _
      $region16: #{resblock_pallas.1} parent=11 // pred_fallthru
        _
      // Predicated region
      $region17: #{resblock_pallas.1} parent=11 // pred_check
        %p143 = pneg %p78
      $region18: #{resblock_pallas.1} parent=11 // pred_check_branch
        %145 = sbr.rel (%p143) target = $region20
      $region19: #{resblock_pallas.1} parent=11 // pred_region
        _
      $region20: #{resblock_pallas.1} parent=11 // pred_fallthru
        _
      // Predicated region
      $region21: #{resblock_pallas.1} parent=11 // pred_check
        %p146 = pneg %p99
      $region22: #{resblock_pallas.1} parent=11 // pred_check_branch
        %148 = sbr.rel (%p146) target = $region24
      $region23: #{resblock_pallas.1} parent=11 // pred_region
        _
      $region24: #{resblock_pallas.1} parent=11 // pred_fallthru
        _
    $region12: #{resblock_pallas.1} parent=5 // pred_fallthru
      _
    %p149 = scmp.lt.s32.totalorder %s10, 2
    // Predicated region
    $region25: #{resblock_pallas.1} parent=5 // pred_check
      %p150 = pneg %p149
    $region26: #{resblock_pallas.1} parent=5 // pred_check_branch
      %152 = sbr.rel (%p150) target = $region28
    $region27: #{resblock_pallas.1} parent=5 // pred_region
      // Predicated region
      $region29: #{resblock_pallas.1} parent=27 // pred_check
        %p153 = pneg %p30
      $region30: #{resblock_pallas.1} parent=27 // pred_check_branch
        %155 = sbr.rel (%p153) target = $region32
      $region31: #{resblock_pallas.1} parent=27 // pred_region
        %p156 = scmp.lt.s32.totalorder %s10, 1
        %s157 = scalar_select %p156, %s10, 1
        %s158 = smul.addr %s157, 2
        %s159 = smul.addr %s158, 8
        %s160 = scalar_lea.vmem %s0, %s159
      $region32: #{resblock_pallas.1} parent=27 // pred_fallthru
        _
    $region28: #{resblock_pallas.1} parent=5 // pred_fallthru
      _
    %p161 = scmp.le.s32.totalorder 1, %s10
    %p162 = scmp.lt.s32.totalorder %s10, 3
    %p163 = pnand %p161, %p162
    %p164 = pneg %p163
    // Predicated region
    $region33: #{resblock_pallas.1} parent=5 // pred_check
      _
    $region34: #{resblock_pallas.1} parent=5 // pred_check_branch
      %166 = sbr.rel (%p163) target = $region36
    $region35: #{resblock_pallas.1} parent=5 // pred_region
      %s167 = ssub.s32 %s10, 1
      %p168 = scmp.lt.s32.totalorder %s15, 1
      %s169 = scalar_select %p168, %s15, 1
      %s170 = smul.addr %s169, 2
      %s171 = smul.addr %s170, 8
      %s172 = scalar_lea.vmem %s0, %s171
      %p173 = pneg %p36
      %p174 = pneg %p33
      %p175 = pneg %p57
      %p176 = pneg %p54
      %p177 = pneg %p78
      %p178 = pneg %p75
      %p179 = pneg %p99
      %p180 = pneg %p96
      %p181 = pneg %p125
      %p182 = pneg %p122
      %p183 = scmp.lt.s32.totalorder %s15, 1
      %s184 = scalar_select %p183, %s15, 1
      %s185 = smul.addr %s184, 2
      %s186 = smul.addr %s185, 8
      %s187 = scalar_lea.vmem %s4, %s186
      %p188 = scmp.lt.s32.totalorder %s15, 1
      %s189 = scalar_select %p188, %s15, 1
      %s190 = smul.addr %s189, 2
      %s191 = smul.addr %s190, 8
      %s192 = scalar_lea.vmem %s0, %s191
      %p193 = scmp.lt.s32.totalorder %s15, 1
      %s194 = scalar_select %p193, %s15, 1
      %s195 = smul.addr %s194, 2
      %s196 = smul.addr %s195, 8
      %s197 = scalar_lea.vmem %s4, %s196
      %v198 = vld [vmem:[%s192] sm:$0xff]
      %v199 = vld [vmem:[%s192 + $0x8] sm:$0xff]
      %200 = vst [vmem:[#allocation2 + $0x8] sm:$0xff] %v198
      %201 = vst [vmem:[#allocation2 + $0x10] sm:$0xff] %v199
      %v202 = vld [vmem:[#allocation2] sm:$0xff]
      %v203 = vld [vmem:[#allocation2 + $0x8] sm:$0xff]
      %v204 = vld [vmem:[#allocation2 + $0x10] sm:$0xff]
      %v205 = vld [vmem:[%s1] ss:$8 sm:$0x3]
      %vm206 = vcmp.gt.f32.partialorder %v205, 0.0
      %v207 = vsel %vm206, 1, 0
      %v208 = vlaneseq
      %v209 = vshrl.u32 %v208, 7
      %v210 = vsub.s32 0, %v209
      %v211 = vrot.slane %v207, %v210
      %v212 = vlaneseq
      %v213 = vshrl.u32 %v212, 7
      %v214 = vsub.s32 1, %v213
      %v215 = vrot.slane %v207, %v214
      %vm216 = vcmp.eq.s32.totalorder %v211, 1
      %vm217 = vcmp.eq.s32.totalorder %v215, 1
      %221 = vrot.lane.b32.xlu0 %v202, 17
      %v222 = vpop.permute.xlu0 %221
      %223 = vrot.lane.b32.xlu0 %v203, 17
      %v224 = vpop.permute.xlu0 %223
      %225 = vrot.lane.b32.xlu0 %v204, 17
      %v226 = vpop.permute.xlu0 %225
      %vm227 = vcmask 138240
      %v228 = vsel %vm227, %v222, %v224
      %v229 = vsel %vm227, %v224, %v226
      %v232 = vsel %vm216, %v228, 0.0
      %v233 = vsel %vm217, %v229, 0.0
      %v234 = vld [vmem:[%s2] sm:$0xff]
      %236 = vset.pattern.permute.xlu0 0
      %237 = vperm.xlu0 %236, %v234
      %v238 = vpop.permute.xlu0 %237
      %v240 = vlaneseq
      %v241 = vshrl.u32 %v240, 7
      %v242 = vsub.s32 0, %v241
      %v243 = vrot.slane %v232, %v242
      %v244 = vlaneseq
      %v245 = vshrl.u32 %v244, 7
      %v246 = vsub.s32 0, %v245
      %v247 = vrot.slane %v233, %v246
      %v248 = vmul.f32 %v238, %v243
      %v249 = vmul.f32 %v238, %v247
      %v250 = vadd.f32 %v248, 0.0
      %v251 = vadd.f32 %v249, 0.0
      %252 = vset.pattern.permute.xlu0 1
      %253 = vperm.xlu0 %252, %v234
      %v254 = vpop.permute.xlu0 %253
      %v256 = vlaneseq
      %v257 = vshrl.u32 %v256, 7
      %v258 = vsub.s32 1, %v257
      %v259 = vrot.slane %v232, %v258
      %v260 = vlaneseq
      %v261 = vshrl.u32 %v260, 7
      %v262 = vsub.s32 1, %v261
      %v263 = vrot.slane %v233, %v262
      %v264 = vmul.f32 %v254, %v259
      %v265 = vmul.f32 %v254, %v263
      %v266 = vadd.f32 %v250, %v264
      %v267 = vadd.f32 %v251, %v265
      %268 = vset.pattern.permute.xlu0 2
      %269 = vperm.xlu0 %268, %v234
      %v270 = vpop.permute.xlu0 %269
      %v272 = vlaneseq
      %v273 = vshrl.u32 %v272, 7
      %v274 = vsub.s32 2, %v273
      %v275 = vrot.slane %v232, %v274
      %v276 = vlaneseq
      %v277 = vshrl.u32 %v276, 7
      %v278 = vsub.s32 2, %v277
      %v279 = vrot.slane %v233, %v278
      %v280 = vmul.f32 %v270, %v275
      %v281 = vmul.f32 %v270, %v279
      %v282 = vadd.f32 %v266, %v280
      %v283 = vadd.f32 %v267, %v281
      %284 = vset.pattern.permute.xlu0 3
      %285 = vperm.xlu0 %284, %v234
      %v286 = vpop.permute.xlu0 %285
      %v288 = vlaneseq
      %v289 = vshrl.u32 %v288, 7
      %v290 = vsub.s32 3, %v289
      %v291 = vrot.slane %v232, %v290
      %v292 = vlaneseq
      %v293 = vshrl.u32 %v292, 7
      %v294 = vsub.s32 3, %v293
      %v295 = vrot.slane %v233, %v294
      %v296 = vmul.f32 %v286, %v291
      %v297 = vmul.f32 %v286, %v295
      %v298 = vadd.f32 %v282, %v296
      %v299 = vadd.f32 %v283, %v297
      %s300 = scalar_lea.vmem %s1, 1
      %v301 = vld [vmem:[%s300] ss:$8 sm:$0x3]
      %vm302 = vcmp.gt.f32.partialorder %v301, 0.0
      %v303 = vsel %vm302, 1, 0
      %v304 = vlaneseq
      %v305 = vshrl.u32 %v304, 7
      %v306 = vsub.s32 0, %v305
      %v307 = vrot.slane %v303, %v306
      %v308 = vlaneseq
      %v309 = vshrl.u32 %v308, 7
      %v310 = vsub.s32 1, %v309
      %v311 = vrot.slane %v303, %v310
      %vm312 = vcmp.eq.s32.totalorder %v307, 1
      %vm313 = vcmp.eq.s32.totalorder %v311, 1
      %314 = vrot.lane.b32.xlu0 %v202, 16
      %v315 = vpop.permute.xlu0 %314
      %316 = vrot.lane.b32.xlu0 %v203, 16
      %v317 = vpop.permute.xlu0 %316
      %318 = vrot.lane.b32.xlu0 %v204, 16
      %v319 = vpop.permute.xlu0 %318
      %vm320 = vcmask 130048
      %v321 = vsel %vm320, %v315, %v317
      %v322 = vsel %vm320, %v317, %v319
      %v325 = vsel %vm312, %v321, 0.0
      %v326 = vsel %vm313, %v322, 0.0
      %s327 = scalar_lea.vmem %s2, 8
      %v328 = vld [vmem:[%s327] sm:$0xff]
      %330 = vset.pattern.permute.xlu0 0
      %331 = vperm.xlu0 %330, %v328
      %v332 = vpop.permute.xlu0 %331
      %v334 = vlaneseq
      %v335 = vshrl.u32 %v334, 7
      %v336 = vsub.s32 0, %v335
      %v337 = vrot.slane %v325, %v336
      %v338 = vlaneseq
      %v339 = vshrl.u32 %v338, 7
      %v340 = vsub.s32 0, %v339
      %v341 = vrot.slane %v326, %v340
      %v342 = vmul.f32 %v332, %v337
      %v343 = vmul.f32 %v332, %v341
      %v344 = vadd.f32 %v298, %v342
      %v345 = vadd.f32 %v299, %v343
      %346 = vset.pattern.permute.xlu0 1
      %347 = vperm.xlu0 %346, %v328
      %v348 = vpop.permute.xlu0 %347
      %v350 = vlaneseq
      %v351 = vshrl.u32 %v350, 7
      %v352 = vsub.s32 1, %v351
      %v353 = vrot.slane %v325, %v352
      %v354 = vlaneseq
      %v355 = vshrl.u32 %v354, 7
      %v356 = vsub.s32 1, %v355
      %v357 = vrot.slane %v326, %v356
      %v358 = vmul.f32 %v348, %v353
      %v359 = vmul.f32 %v348, %v357
      %v360 = vadd.f32 %v344, %v358
      %v361 = vadd.f32 %v345, %v359
      %362 = vset.pattern.permute.xlu0 2
      %363 = vperm.xlu0 %362, %v328
      %v364 = vpop.permute.xlu0 %363
      %v366 = vlaneseq
      %v367 = vshrl.u32 %v366, 7
      %v368 = vsub.s32 2, %v367
      %v369 = vrot.slane %v325, %v368
      %v370 = vlaneseq
      %v371 = vshrl.u32 %v370, 7
      %v372 = vsub.s32 2, %v371
      %v373 = vrot.slane %v326, %v372
      %v374 = vmul.f32 %v364, %v369
      %v375 = vmul.f32 %v364, %v373
      %v376 = vadd.f32 %v360, %v374
      %v377 = vadd.f32 %v361, %v375
      %378 = vset.pattern.permute.xlu0 3
      %379 = vperm.xlu0 %378, %v328
      %v380 = vpop.permute.xlu0 %379
      %v382 = vlaneseq
      %v383 = vshrl.u32 %v382, 7
      %v384 = vsub.s32 3, %v383
      %v385 = vrot.slane %v325, %v384
      %v386 = vlaneseq
      %v387 = vshrl.u32 %v386, 7
      %v388 = vsub.s32 3, %v387
      %v389 = vrot.slane %v326, %v388
      %v390 = vmul.f32 %v380, %v385
      %v391 = vmul.f32 %v380, %v389
      %v392 = vadd.f32 %v376, %v390
      %v393 = vadd.f32 %v377, %v391
      %s394 = scalar_lea.vmem %s1, 2
      %v395 = vld [vmem:[%s394] ss:$8 sm:$0x3]
      %vm396 = vcmp.gt.f32.partialorder %v395, 0.0
      %v397 = vsel %vm396, 1, 0
      %v398 = vlaneseq
      %v399 = vshrl.u32 %v398, 7
      %v400 = vsub.s32 0, %v399
      %v401 = vrot.slane %v397, %v400
      %v402 = vlaneseq
      %v403 = vshrl.u32 %v402, 7
      %v404 = vsub.s32 1, %v403
      %v405 = vrot.slane %v397, %v404
      %vm406 = vcmp.eq.s32.totalorder %v401, 1
      %vm407 = vcmp.eq.s32.totalorder %v405, 1
      %408 = vrot.lane.b32.xlu0 %v202, 15
      %v409 = vpop.permute.xlu0 %408
      %410 = vrot.lane.b32.xlu0 %v203, 15
      %v411 = vpop.permute.xlu0 %410
      %412 = vrot.lane.b32.xlu0 %v204, 15
      %v413 = vpop.permute.xlu0 %412
      %vm414 = vcmask 121856
      %v415 = vsel %vm414, %v409, %v411
      %v416 = vsel %vm414, %v411, %v413
      %v419 = vsel %vm406, %v415, 0.0
      %v420 = vsel %vm407, %v416, 0.0
      %s421 = scalar_lea.vmem %s2, 16
      %v422 = vld [vmem:[%s421] sm:$0xff]
      %424 = vset.pattern.permute.xlu0 0
      %425 = vperm.xlu0 %424, %v422
      %v426 = vpop.permute.xlu0 %425
      %v428 = vlaneseq
      %v429 = vshrl.u32 %v428, 7
      %v430 = vsub.s32 0, %v429
      %v431 = vrot.slane %v419, %v430
      %v432 = vlaneseq
      %v433 = vshrl.u32 %v432, 7
      %v434 = vsub.s32 0, %v433
      %v435 = vrot.slane %v420, %v434
      %v436 = vmul.f32 %v426, %v431
      %v437 = vmul.f32 %v426, %v435
      %v438 = vadd.f32 %v392, %v436
      %v439 = vadd.f32 %v393, %v437
      %440 = vset.pattern.permute.xlu0 1
      %441 = vperm.xlu0 %440, %v422
      %v442 = vpop.permute.xlu0 %441
      %v444 = vlaneseq
      %v445 = vshrl.u32 %v444, 7
      %v446 = vsub.s32 1, %v445
      %v447 = vrot.slane %v419, %v446
      %v448 = vlaneseq
      %v449 = vshrl.u32 %v448, 7
      %v450 = vsub.s32 1, %v449
      %v451 = vrot.slane %v420, %v450
      %v452 = vmul.f32 %v442, %v447
      %v453 = vmul.f32 %v442, %v451
      %v454 = vadd.f32 %v438, %v452
      %v455 = vadd.f32 %v439, %v453
      %456 = vset.pattern.permute.xlu0 2
      %457 = vperm.xlu0 %456, %v422
      %v458 = vpop.permute.xlu0 %457
      %v460 = vlaneseq
      %v461 = vshrl.u32 %v460, 7
      %v462 = vsub.s32 2, %v461
      %v463 = vrot.slane %v419, %v462
      %v464 = vlaneseq
      %v465 = vshrl.u32 %v464, 7
      %v466 = vsub.s32 2, %v465
      %v467 = vrot.slane %v420, %v466
      %v468 = vmul.f32 %v458, %v463
      %v469 = vmul.f32 %v458, %v467
      %v470 = vadd.f32 %v454, %v468
      %v471 = vadd.f32 %v455, %v469
      %472 = vset.pattern.permute.xlu0 3
      %473 = vperm.xlu0 %472, %v422
      %v474 = vpop.permute.xlu0 %473
      %v476 = vlaneseq
      %v477 = vshrl.u32 %v476, 7
      %v478 = vsub.s32 3, %v477
      %v479 = vrot.slane %v419, %v478
      %v480 = vlaneseq
      %v481 = vshrl.u32 %v480, 7
      %v482 = vsub.s32 3, %v481
      %v483 = vrot.slane %v420, %v482
      %v484 = vmul.f32 %v474, %v479
      %v485 = vmul.f32 %v474, %v483
      %v486 = vadd.f32 %v470, %v484
      %v487 = vadd.f32 %v471, %v485
      %s488 = scalar_lea.vmem %s1, 3
      %v489 = vld [vmem:[%s488] ss:$8 sm:$0x3]
      %vm490 = vcmp.gt.f32.partialorder %v489, 0.0
      %v491 = vsel %vm490, 1, 0
      %v492 = vlaneseq
      %v493 = vshrl.u32 %v492, 7
      %v494 = vsub.s32 0, %v493
      %v495 = vrot.slane %v491, %v494
      %v496 = vlaneseq
      %v497 = vshrl.u32 %v496, 7
      %v498 = vsub.s32 1, %v497
      %v499 = vrot.slane %v491, %v498
      %vm500 = vcmp.eq.s32.totalorder %v495, 1
      %vm501 = vcmp.eq.s32.totalorder %v499, 1
      %502 = vrot.lane.b32.xlu0 %v202, 1
      %v503 = vpop.permute.xlu0 %502
      %504 = vrot.lane.b32.xlu0 %v203, 1
      %v505 = vpop.permute.xlu0 %504
      %506 = vrot.lane.b32.xlu0 %v204, 1
      %v507 = vpop.permute.xlu0 %506
      %vm508 = vcmask 7168
      %v509 = vsel %vm508, %v503, %v505
      %v510 = vsel %vm508, %v505, %v507
      %v513 = vsel %vm500, %v509, 0.0
      %v514 = vsel %vm501, %v510, 0.0
      %s515 = scalar_lea.vmem %s2, 24
      %v516 = vld [vmem:[%s515] sm:$0xff]
      %518 = vset.pattern.permute.xlu0 0
      %519 = vperm.xlu0 %518, %v516
      %v520 = vpop.permute.xlu0 %519
      %v522 = vlaneseq
      %v523 = vshrl.u32 %v522, 7
      %v524 = vsub.s32 0, %v523
      %v525 = vrot.slane %v513, %v524
      %v526 = vlaneseq
      %v527 = vshrl.u32 %v526, 7
      %v528 = vsub.s32 0, %v527
      %v529 = vrot.slane %v514, %v528
      %v530 = vmul.f32 %v520, %v525
      %v531 = vmul.f32 %v520, %v529
      %v532 = vadd.f32 %v486, %v530
      %v533 = vadd.f32 %v487, %v531
      %534 = vset.pattern.permute.xlu0 1
      %535 = vperm.xlu0 %534, %v516
      %v536 = vpop.permute.xlu0 %535
      %v538 = vlaneseq
      %v539 = vshrl.u32 %v538, 7
      %v540 = vsub.s32 1, %v539
      %v541 = vrot.slane %v513, %v540
      %v542 = vlaneseq
      %v543 = vshrl.u32 %v542, 7
      %v544 = vsub.s32 1, %v543
      %v545 = vrot.slane %v514, %v544
      %v546 = vmul.f32 %v536, %v541
      %v547 = vmul.f32 %v536, %v545
      %v548 = vadd.f32 %v532, %v546
      %v549 = vadd.f32 %v533, %v547
      %550 = vset.pattern.permute.xlu0 2
      %551 = vperm.xlu0 %550, %v516
      %v552 = vpop.permute.xlu0 %551
      %v554 = vlaneseq
      %v555 = vshrl.u32 %v554, 7
      %v556 = vsub.s32 2, %v555
      %v557 = vrot.slane %v513, %v556
      %v558 = vlaneseq
      %v559 = vshrl.u32 %v558, 7
      %v560 = vsub.s32 2, %v559
      %v561 = vrot.slane %v514, %v560
      %v562 = vmul.f32 %v552, %v557
      %v563 = vmul.f32 %v552, %v561
      %v564 = vadd.f32 %v548, %v562
      %v565 = vadd.f32 %v549, %v563
      %566 = vset.pattern.permute.xlu0 3
      %567 = vperm.xlu0 %566, %v516
      %v568 = vpop.permute.xlu0 %567
      %v570 = vlaneseq
      %v571 = vshrl.u32 %v570, 7
      %v572 = vsub.s32 3, %v571
      %v573 = vrot.slane %v513, %v572
      %v574 = vlaneseq
      %v575 = vshrl.u32 %v574, 7
      %v576 = vsub.s32 3, %v575
      %v577 = vrot.slane %v514, %v576
      %v578 = vmul.f32 %v568, %v573
      %v579 = vmul.f32 %v568, %v577
      %v580 = vadd.f32 %v564, %v578
      %v581 = vadd.f32 %v565, %v579
      %s582 = scalar_lea.vmem %s2, 32
      %v583 = vld [vmem:[%s582] sm:$0xff]
      %585 = vset.pattern.permute.xlu0 0
      %586 = vperm.xlu0 %585, %v583
      %v587 = vpop.permute.xlu0 %586
      %v589 = vlaneseq
      %v590 = vshrl.u32 %v589, 7
      %v591 = vsub.s32 0, %v590
      %v592 = vrot.slane %v203, %v591
      %v593 = vlaneseq
      %v594 = vshrl.u32 %v593, 7
      %v595 = vsub.s32 0, %v594
      %v596 = vrot.slane %v204, %v595
      %v597 = vmul.f32 %v587, %v592
      %v598 = vmul.f32 %v587, %v596
      %v599 = vadd.f32 %v580, %v597
      %v600 = vadd.f32 %v581, %v598
      %601 = vset.pattern.permute.xlu0 1
      %602 = vperm.xlu0 %601, %v583
      %v603 = vpop.permute.xlu0 %602
      %v605 = vlaneseq
      %v606 = vshrl.u32 %v605, 7
      %v607 = vsub.s32 1, %v606
      %v608 = vrot.slane %v203, %v607
      %v609 = vlaneseq
      %v610 = vshrl.u32 %v609, 7
      %v611 = vsub.s32 1, %v610
      %v612 = vrot.slane %v204, %v611
      %v613 = vmul.f32 %v603, %v608
      %v614 = vmul.f32 %v603, %v612
      %v615 = vadd.f32 %v599, %v613
      %v616 = vadd.f32 %v600, %v614
      %617 = vset.pattern.permute.xlu0 2
      %618 = vperm.xlu0 %617, %v583
      %v619 = vpop.permute.xlu0 %618
      %v621 = vlaneseq
      %v622 = vshrl.u32 %v621, 7
      %v623 = vsub.s32 2, %v622
      %v624 = vrot.slane %v203, %v623
      %v625 = vlaneseq
      %v626 = vshrl.u32 %v625, 7
      %v627 = vsub.s32 2, %v626
      %v628 = vrot.slane %v204, %v627
      %v629 = vmul.f32 %v619, %v624
      %v630 = vmul.f32 %v619, %v628
      %v631 = vadd.f32 %v615, %v629
      %v632 = vadd.f32 %v616, %v630
      %633 = vset.pattern.permute.xlu0 3
      %634 = vperm.xlu0 %633, %v583
      %v635 = vpop.permute.xlu0 %634
      %v637 = vlaneseq
      %v638 = vshrl.u32 %v637, 7
      %v639 = vsub.s32 3, %v638
      %v640 = vrot.slane %v203, %v639
      %v641 = vlaneseq
      %v642 = vshrl.u32 %v641, 7
      %v643 = vsub.s32 3, %v642
      %v644 = vrot.slane %v204, %v643
      %v645 = vmul.f32 %v635, %v640
      %v646 = vmul.f32 %v635, %v644
      %v647 = vadd.f32 %v631, %v645
      %v648 = vadd.f32 %v632, %v646
      %v649 = vld [vmem:[#allocation2 + $0x8] sm:$0xff]
      %v650 = vld [vmem:[#allocation2 + $0x10] sm:$0xff]
      %v651 = vld [vmem:[#allocation2 + $0x18] sm:$0xff]
      %s652 = scalar_lea.vmem %s1, 5
      %v653 = vld [vmem:[%s652] ss:$8 sm:$0x3]
      %vm654 = vcmp.gt.f32.partialorder %v653, 0.0
      %v655 = vsel %vm654, 1, 0
      %v656 = vlaneseq
      %v657 = vshrl.u32 %v656, 7
      %v658 = vsub.s32 0, %v657
      %v659 = vrot.slane %v655, %v658
      %v660 = vlaneseq
      %v661 = vshrl.u32 %v660, 7
      %v662 = vsub.s32 1, %v661
      %v663 = vrot.slane %v655, %v662
      %vm664 = vcmp.eq.s32.totalorder %v659, 1
      %vm665 = vcmp.eq.s32.totalorder %v663, 1
      %669 = vrot.lane.b32.xlu0 %v649, 127
      %v670 = vpop.permute.xlu0 %669
      %671 = vrot.lane.b32.xlu0 %v650, 127
      %v672 = vpop.permute.xlu0 %671
      %673 = vrot.lane.b32.xlu0 %v651, 127
      %v674 = vpop.permute.xlu0 %673
      %vm675 = vcmask 1039360
      %v676 = vsel %vm675, %v670, %v672
      %v677 = vsel %vm675, %v672, %v674
      %v680 = vsel %vm664, %v676, 0.0
      %v681 = vsel %vm665, %v677, 0.0
      %s682 = scalar_lea.vmem %s2, 40
      %v683 = vld [vmem:[%s682] sm:$0xff]
      %685 = vset.pattern.permute.xlu0 0
      %686 = vperm.xlu0 %685, %v683
      %v687 = vpop.permute.xlu0 %686
      %v689 = vlaneseq
      %v690 = vshrl.u32 %v689, 7
      %v691 = vsub.s32 0, %v690
      %v692 = vrot.slane %v680, %v691
      %v693 = vlaneseq
      %v694 = vshrl.u32 %v693, 7
      %v695 = vsub.s32 0, %v694
      %v696 = vrot.slane %v681, %v695
      %v697 = vmul.f32 %v687, %v692
      %v698 = vmul.f32 %v687, %v696
      %v699 = vadd.f32 %v647, %v697
      %v700 = vadd.f32 %v648, %v698
      %701 = vset.pattern.permute.xlu0 1
      %702 = vperm.xlu0 %701, %v683
      %v703 = vpop.permute.xlu0 %702
      %v705 = vlaneseq
      %v706 = vshrl.u32 %v705, 7
      %v707 = vsub.s32 1, %v706
      %v708 = vrot.slane %v680, %v707
      %v709 = vlaneseq
      %v710 = vshrl.u32 %v709, 7
      %v711 = vsub.s32 1, %v710
      %v712 = vrot.slane %v681, %v711
      %v713 = vmul.f32 %v703, %v708
      %v714 = vmul.f32 %v703, %v712
      %v715 = vadd.f32 %v699, %v713
      %v716 = vadd.f32 %v700, %v714
      %717 = vset.pattern.permute.xlu0 2
      %718 = vperm.xlu0 %717, %v683
      %v719 = vpop.permute.xlu0 %718
      %v721 = vlaneseq
      %v722 = vshrl.u32 %v721, 7
      %v723 = vsub.s32 2, %v722
      %v724 = vrot.slane %v680, %v723
      %v725 = vlaneseq
      %v726 = vshrl.u32 %v725, 7
      %v727 = vsub.s32 2, %v726
      %v728 = vrot.slane %v681, %v727
      %v729 = vmul.f32 %v719, %v724
      %v730 = vmul.f32 %v719, %v728
      %v731 = vadd.f32 %v715, %v729
      %v732 = vadd.f32 %v716, %v730
      %733 = vset.pattern.permute.xlu0 3
      %734 = vperm.xlu0 %733, %v683
      %v735 = vpop.permute.xlu0 %734
      %v737 = vlaneseq
      %v738 = vshrl.u32 %v737, 7
      %v739 = vsub.s32 3, %v738
      %v740 = vrot.slane %v680, %v739
      %v741 = vlaneseq
      %v742 = vshrl.u32 %v741, 7
      %v743 = vsub.s32 3, %v742
      %v744 = vrot.slane %v681, %v743
      %v745 = vmul.f32 %v735, %v740
      %v746 = vmul.f32 %v735, %v744
      %v747 = vadd.f32 %v731, %v745
      %v748 = vadd.f32 %v732, %v746
      %s749 = scalar_lea.vmem %s1, 6
      %v750 = vld [vmem:[%s749] ss:$8 sm:$0x3]
      %vm751 = vcmp.gt.f32.partialorder %v750, 0.0
      %v752 = vsel %vm751, 1, 0
      %v753 = vlaneseq
      %v754 = vshrl.u32 %v753, 7
      %v755 = vsub.s32 0, %v754
      %v756 = vrot.slane %v752, %v755
      %v757 = vlaneseq
      %v758 = vshrl.u32 %v757, 7
      %v759 = vsub.s32 1, %v758
      %v760 = vrot.slane %v752, %v759
      %vm761 = vcmp.eq.s32.totalorder %v756, 1
      %vm762 = vcmp.eq.s32.totalorder %v760, 1
      %763 = vrot.lane.b32.xlu0 %v649, 113
      %v764 = vpop.permute.xlu0 %763
      %765 = vrot.lane.b32.xlu0 %v650, 113
      %v766 = vpop.permute.xlu0 %765
      %767 = vrot.lane.b32.xlu0 %v651, 113
      %v768 = vpop.permute.xlu0 %767
      %vm769 = vcmask 924672
      %v770 = vsel %vm769, %v764, %v766
      %v771 = vsel %vm769, %v766, %v768
      %v774 = vsel %vm761, %v770, 0.0
      %v775 = vsel %vm762, %v771, 0.0
      %s776 = scalar_lea.vmem %s2, 48
      %v777 = vld [vmem:[%s776] sm:$0xff]
      %779 = vset.pattern.permute.xlu0 0
      %780 = vperm.xlu0 %779, %v777
      %v781 = vpop.permute.xlu0 %780
      %v783 = vlaneseq
      %v784 = vshrl.u32 %v783, 7
      %v785 = vsub.s32 0, %v784
      %v786 = vrot.slane %v774, %v785
      %v787 = vlaneseq
      %v788 = vshrl.u32 %v787, 7
      %v789 = vsub.s32 0, %v788
      %v790 = vrot.slane %v775, %v789
      %v791 = vmul.f32 %v781, %v786
      %v792 = vmul.f32 %v781, %v790
      %v793 = vadd.f32 %v747, %v791
      %v794 = vadd.f32 %v748, %v792
      %795 = vset.pattern.permute.xlu0 1
      %796 = vperm.xlu0 %795, %v777
      %v797 = vpop.permute.xlu0 %796
      %v799 = vlaneseq
      %v800 = vshrl.u32 %v799, 7
      %v801 = vsub.s32 1, %v800
      %v802 = vrot.slane %v774, %v801
      %v803 = vlaneseq
      %v804 = vshrl.u32 %v803, 7
      %v805 = vsub.s32 1, %v804
      %v806 = vrot.slane %v775, %v805
      %v807 = vmul.f32 %v797, %v802
      %v808 = vmul.f32 %v797, %v806
      %v809 = vadd.f32 %v793, %v807
      %v810 = vadd.f32 %v794, %v808
      %811 = vset.pattern.permute.xlu0 2
      %812 = vperm.xlu0 %811, %v777
      %v813 = vpop.permute.xlu0 %812
      %v815 = vlaneseq
      %v816 = vshrl.u32 %v815, 7
      %v817 = vsub.s32 2, %v816
      %v818 = vrot.slane %v774, %v817
      %v819 = vlaneseq
      %v820 = vshrl.u32 %v819, 7
      %v821 = vsub.s32 2, %v820
      %v822 = vrot.slane %v775, %v821
      %v823 = vmul.f32 %v813, %v818
      %v824 = vmul.f32 %v813, %v822
      %v825 = vadd.f32 %v809, %v823
      %v826 = vadd.f32 %v810, %v824
      %827 = vset.pattern.permute.xlu0 3
      %828 = vperm.xlu0 %827, %v777
      %v829 = vpop.permute.xlu0 %828
      %v831 = vlaneseq
      %v832 = vshrl.u32 %v831, 7
      %v833 = vsub.s32 3, %v832
      %v834 = vrot.slane %v774, %v833
      %v835 = vlaneseq
      %v836 = vshrl.u32 %v835, 7
      %v837 = vsub.s32 3, %v836
      %v838 = vrot.slane %v775, %v837
      %v839 = vmul.f32 %v829, %v834
      %v840 = vmul.f32 %v829, %v838
      %v841 = vadd.f32 %v825, %v839
      %v842 = vadd.f32 %v826, %v840
      %s843 = scalar_lea.vmem %s1, 7
      %v844 = vld [vmem:[%s843] ss:$8 sm:$0x3]
      %vm845 = vcmp.gt.f32.partialorder %v844, 0.0
      %v846 = vsel %vm845, 1, 0
      %v847 = vlaneseq
      %v848 = vshrl.u32 %v847, 7
      %v849 = vsub.s32 0, %v848
      %v850 = vrot.slane %v846, %v849
      %v851 = vlaneseq
      %v852 = vshrl.u32 %v851, 7
      %v853 = vsub.s32 1, %v852
      %v854 = vrot.slane %v846, %v853
      %vm855 = vcmp.eq.s32.totalorder %v850, 1
      %vm856 = vcmp.eq.s32.totalorder %v854, 1
      %857 = vrot.lane.b32.xlu0 %v649, 112
      %v858 = vpop.permute.xlu0 %857
      %859 = vrot.lane.b32.xlu0 %v650, 112
      %v860 = vpop.permute.xlu0 %859
      %861 = vrot.lane.b32.xlu0 %v651, 112
      %v862 = vpop.permute.xlu0 %861
      %vm863 = vcmask 916480
      %v864 = vsel %vm863, %v858, %v860
      %v865 = vsel %vm863, %v860, %v862
      %v868 = vsel %vm855, %v864, 0.0
      %v869 = vsel %vm856, %v865, 0.0
      %s870 = scalar_lea.vmem %s2, 56
      %v871 = vld [vmem:[%s870] sm:$0xff]
      %873 = vset.pattern.permute.xlu0 0
      %874 = vperm.xlu0 %873, %v871
      %v875 = vpop.permute.xlu0 %874
      %v877 = vlaneseq
      %v878 = vshrl.u32 %v877, 7
      %v879 = vsub.s32 0, %v878
      %v880 = vrot.slane %v868, %v879
      %v881 = vlaneseq
      %v882 = vshrl.u32 %v881, 7
      %v883 = vsub.s32 0, %v882
      %v884 = vrot.slane %v869, %v883
      %v885 = vmul.f32 %v875, %v880
      %v886 = vmul.f32 %v875, %v884
      %v887 = vadd.f32 %v841, %v885
      %v888 = vadd.f32 %v842, %v886
      %889 = vset.pattern.permute.xlu0 1
      %890 = vperm.xlu0 %889, %v871
      %v891 = vpop.permute.xlu0 %890
      %v893 = vlaneseq
      %v894 = vshrl.u32 %v893, 7
      %v895 = vsub.s32 1, %v894
      %v896 = vrot.slane %v868, %v895
      %v897 = vlaneseq
      %v898 = vshrl.u32 %v897, 7
      %v899 = vsub.s32 1, %v898
      %v900 = vrot.slane %v869, %v899
      %v901 = vmul.f32 %v891, %v896
      %v902 = vmul.f32 %v891, %v900
      %v903 = vadd.f32 %v887, %v901
      %v904 = vadd.f32 %v888, %v902
      %905 = vset.pattern.permute.xlu0 2
      %906 = vperm.xlu0 %905, %v871
      %v907 = vpop.permute.xlu0 %906
      %v909 = vlaneseq
      %v910 = vshrl.u32 %v909, 7
      %v911 = vsub.s32 2, %v910
      %v912 = vrot.slane %v868, %v911
      %v913 = vlaneseq
      %v914 = vshrl.u32 %v913, 7
      %v915 = vsub.s32 2, %v914
      %v916 = vrot.slane %v869, %v915
      %v917 = vmul.f32 %v907, %v912
      %v918 = vmul.f32 %v907, %v916
      %v919 = vadd.f32 %v903, %v917
      %v920 = vadd.f32 %v904, %v918
      %921 = vset.pattern.permute.xlu0 3
      %922 = vperm.xlu0 %921, %v871
      %v923 = vpop.permute.xlu0 %922
      %v925 = vlaneseq
      %v926 = vshrl.u32 %v925, 7
      %v927 = vsub.s32 3, %v926
      %v928 = vrot.slane %v868, %v927
      %v929 = vlaneseq
      %v930 = vshrl.u32 %v929, 7
      %v931 = vsub.s32 3, %v930
      %v932 = vrot.slane %v869, %v931
      %v933 = vmul.f32 %v923, %v928
      %v934 = vmul.f32 %v923, %v932
      %v935 = vadd.f32 %v919, %v933
      %v936 = vadd.f32 %v920, %v934
      %s937 = scalar_lea.vmem %s1, 16
      %v938 = vld [vmem:[%s937] ss:$8 sm:$0x3]
      %vm939 = vcmp.gt.f32.partialorder %v938, 0.0
      %v940 = vsel %vm939, 1, 0
      %v941 = vlaneseq
      %v942 = vshrl.u32 %v941, 7
      %v943 = vsub.s32 0, %v942
      %v944 = vrot.slane %v940, %v943
      %v945 = vlaneseq
      %v946 = vshrl.u32 %v945, 7
      %v947 = vsub.s32 1, %v946
      %v948 = vrot.slane %v940, %v947
      %vm949 = vcmp.eq.s32.totalorder %v944, 1
      %vm950 = vcmp.eq.s32.totalorder %v948, 1
      %951 = vrot.lane.b32.xlu0 %v649, 111
      %v952 = vpop.permute.xlu0 %951
      %953 = vrot.lane.b32.xlu0 %v650, 111
      %v954 = vpop.permute.xlu0 %953
      %955 = vrot.lane.b32.xlu0 %v651, 111
      %v956 = vpop.permute.xlu0 %955
      %vm957 = vcmask 908288
      %v958 = vsel %vm957, %v952, %v954
      %v959 = vsel %vm957, %v954, %v956
      %v962 = vsel %vm949, %v958, 0.0
      %v963 = vsel %vm950, %v959, 0.0
      %s964 = scalar_lea.vmem %s2, 64
      %v965 = vld [vmem:[%s964] sm:$0xff]
      %967 = vset.pattern.permute.xlu0 0
      %968 = vperm.xlu0 %967, %v965
      %v969 = vpop.permute.xlu0 %968
      %v971 = vlaneseq
      %v972 = vshrl.u32 %v971, 7
      %v973 = vsub.s32 0, %v972
      %v974 = vrot.slane %v962, %v973
      %v975 = vlaneseq
      %v976 = vshrl.u32 %v975, 7
      %v977 = vsub.s32 0, %v976
      %v978 = vrot.slane %v963, %v977
      %v979 = vmul.f32 %v969, %v974
      %v980 = vmul.f32 %v969, %v978
      %v981 = vadd.f32 %v935, %v979
      %v982 = vadd.f32 %v936, %v980
      %983 = vset.pattern.permute.xlu0 1
      %984 = vperm.xlu0 %983, %v965
      %v985 = vpop.permute.xlu0 %984
      %v987 = vlaneseq
      %v988 = vshrl.u32 %v987, 7
      %v989 = vsub.s32 1, %v988
      %v990 = vrot.slane %v962, %v989
      %v991 = vlaneseq
      %v992 = vshrl.u32 %v991, 7
      %v993 = vsub.s32 1, %v992
      %v994 = vrot.slane %v963, %v993
      %v995 = vmul.f32 %v985, %v990
      %v996 = vmul.f32 %v985, %v994
      %v997 = vadd.f32 %v981, %v995
      %v998 = vadd.f32 %v982, %v996
      %999 = vset.pattern.permute.xlu0 2
      %1000 = vperm.xlu0 %999, %v965
      %v1001 = vpop.permute.xlu0 %1000
      %v1003 = vlaneseq
      %v1004 = vshrl.u32 %v1003, 7
      %v1005 = vsub.s32 2, %v1004
      %v1006 = vrot.slane %v962, %v1005
      %v1007 = vlaneseq
      %v1008 = vshrl.u32 %v1007, 7
      %v1009 = vsub.s32 2, %v1008
      %v1010 = vrot.slane %v963, %v1009
      %v1011 = vmul.f32 %v1001, %v1006
      %v1012 = vmul.f32 %v1001, %v1010
      %v1013 = vadd.f32 %v997, %v1011
      %v1014 = vadd.f32 %v998, %v1012
      %1015 = vset.pattern.permute.xlu0 3
      %1016 = vperm.xlu0 %1015, %v965
      %v1017 = vpop.permute.xlu0 %1016
      %v1019 = vlaneseq
      %v1020 = vshrl.u32 %v1019, 7
      %v1021 = vsub.s32 3, %v1020
      %v1022 = vrot.slane %v962, %v1021
      %v1023 = vlaneseq
      %v1024 = vshrl.u32 %v1023, 7
      %v1025 = vsub.s32 3, %v1024
      %v1026 = vrot.slane %v963, %v1025
      %v1027 = vmul.f32 %v1017, %v1022
      %v1028 = vmul.f32 %v1017, %v1026
      %v1029 = vadd.f32 %v1013, %v1027
      %v1030 = vadd.f32 %v1014, %v1028
      %v1031 = vadd.f32 %v1029, %v1030
      %1032 = vadd.xlane.f32.xlu0 %v1031
      %v1033 = vpop.xlane.xlu0 %1032
      %v1034 = vmul.f32 %v1033, 0.00390625
      %v1035 = vmul.f32 %v1029, %v1029
      %v1036 = vmul.f32 %v1030, %v1030
      %v1037 = vadd.f32 %v1035, %v1036
      %1038 = vadd.xlane.f32.xlu0 %v1037
      %v1039 = vpop.xlane.xlu0 %1038
      %v1040 = vmul.f32 %v1039, 0.00390625
      %v1041 = vmul.f32 %v1034, %v1034
      %v1042 = vsub.f32 %v1040, %v1041
      %v1043 = vmax.f32 %v1042, 0.0
      %v1044 = vsub.f32 %v1029, %v1034
      %v1045 = vsub.f32 %v1030, %v1034
      %v1046 = vadd.f32 %v1043, 1e-05
      %v1047 = vrsqrt.pop %v1046
      %v1048 = vmul.f32 %v1044, %v1047
      %v1049 = vmul.f32 %v1045, %v1047
      %v1050 = vmax.f32 %v1048, 0.0
      %v1051 = vmax.f32 %v1049, 0.0
      %1052 = vst [vmem:[#allocation2 + $0x8] sm:$0xff] %v1050
      %1053 = vst [vmem:[#allocation2 + $0x10] sm:$0xff] %v1051
      %v1054 = vld [vmem:[#allocation2] sm:$0xff]
      %v1055 = vld [vmem:[#allocation2 + $0x8] sm:$0xff]
      %v1056 = vld [vmem:[#allocation2 + $0x10] sm:$0xff]
      %v1057 = vld [vmem:[%s1] ss:$8 sm:$0x3]
      %vm1058 = vcmp.gt.f32.partialorder %v1057, 0.0
      %v1059 = vsel %vm1058, 1, 0
      %v1060 = vlaneseq
      %v1061 = vshrl.u32 %v1060, 7
      %v1062 = vsub.s32 0, %v1061
      %v1063 = vrot.slane %v1059, %v1062
      %v1064 = vlaneseq
      %v1065 = vshrl.u32 %v1064, 7
      %v1066 = vsub.s32 1, %v1065
      %v1067 = vrot.slane %v1059, %v1066
      %vm1068 = vcmp.eq.s32.totalorder %v1063, 1
      %vm1069 = vcmp.eq.s32.totalorder %v1067, 1
      %1073 = vrot.lane.b32.xlu0 %v1054, 17
      %v1074 = vpop.permute.xlu0 %1073
      %1075 = vrot.lane.b32.xlu0 %v1055, 17
      %v1076 = vpop.permute.xlu0 %1075
      %1077 = vrot.lane.b32.xlu0 %v1056, 17
      %v1078 = vpop.permute.xlu0 %1077
      %v1079 = vsel %vm227, %v1074, %v1076
      %v1080 = vsel %vm227, %v1076, %v1078
      %v1083 = vsel %vm1068, %v1079, 0.0
      %v1084 = vsel %vm1069, %v1080, 0.0
      %v1085 = vld [vmem:[%s3] sm:$0xff]
      %1087 = vset.pattern.permute.xlu0 0
      %1088 = vperm.xlu0 %1087, %v1085
      %v1089 = vpop.permute.xlu0 %1088
      %v1091 = vlaneseq
      %v1092 = vshrl.u32 %v1091, 7
      %v1093 = vsub.s32 0, %v1092
      %v1094 = vrot.slane %v1083, %v1093
      %v1095 = vlaneseq
      %v1096 = vshrl.u32 %v1095, 7
      %v1097 = vsub.s32 0, %v1096
      %v1098 = vrot.slane %v1084, %v1097
      %v1099 = vmul.f32 %v1089, %v1094
      %v1100 = vmul.f32 %v1089, %v1098
      %v1101 = vadd.f32 %v1099, 0.0
      %v1102 = vadd.f32 %v1100, 0.0
      %1103 = vset.pattern.permute.xlu0 1
      %1104 = vperm.xlu0 %1103, %v1085
      %v1105 = vpop.permute.xlu0 %1104
      %v1107 = vlaneseq
      %v1108 = vshrl.u32 %v1107, 7
      %v1109 = vsub.s32 1, %v1108
      %v1110 = vrot.slane %v1083, %v1109
      %v1111 = vlaneseq
      %v1112 = vshrl.u32 %v1111, 7
      %v1113 = vsub.s32 1, %v1112
      %v1114 = vrot.slane %v1084, %v1113
      %v1115 = vmul.f32 %v1105, %v1110
      %v1116 = vmul.f32 %v1105, %v1114
      %v1117 = vadd.f32 %v1101, %v1115
      %v1118 = vadd.f32 %v1102, %v1116
      %1119 = vset.pattern.permute.xlu0 2
      %1120 = vperm.xlu0 %1119, %v1085
      %v1121 = vpop.permute.xlu0 %1120
      %v1123 = vlaneseq
      %v1124 = vshrl.u32 %v1123, 7
      %v1125 = vsub.s32 2, %v1124
      %v1126 = vrot.slane %v1083, %v1125
      %v1127 = vlaneseq
      %v1128 = vshrl.u32 %v1127, 7
      %v1129 = vsub.s32 2, %v1128
      %v1130 = vrot.slane %v1084, %v1129
      %v1131 = vmul.f32 %v1121, %v1126
      %v1132 = vmul.f32 %v1121, %v1130
      %v1133 = vadd.f32 %v1117, %v1131
      %v1134 = vadd.f32 %v1118, %v1132
      %1135 = vset.pattern.permute.xlu0 3
      %1136 = vperm.xlu0 %1135, %v1085
      %v1137 = vpop.permute.xlu0 %1136
      %v1139 = vlaneseq
      %v1140 = vshrl.u32 %v1139, 7
      %v1141 = vsub.s32 3, %v1140
      %v1142 = vrot.slane %v1083, %v1141
      %v1143 = vlaneseq
      %v1144 = vshrl.u32 %v1143, 7
      %v1145 = vsub.s32 3, %v1144
      %v1146 = vrot.slane %v1084, %v1145
      %v1147 = vmul.f32 %v1137, %v1142
      %v1148 = vmul.f32 %v1137, %v1146
      %v1149 = vadd.f32 %v1133, %v1147
      %v1150 = vadd.f32 %v1134, %v1148
      %v1151 = vld [vmem:[%s300] ss:$8 sm:$0x3]
      %vm1152 = vcmp.gt.f32.partialorder %v1151, 0.0
      %v1153 = vsel %vm1152, 1, 0
      %v1154 = vlaneseq
      %v1155 = vshrl.u32 %v1154, 7
      %v1156 = vsub.s32 0, %v1155
      %v1157 = vrot.slane %v1153, %v1156
      %v1158 = vlaneseq
      %v1159 = vshrl.u32 %v1158, 7
      %v1160 = vsub.s32 1, %v1159
      %v1161 = vrot.slane %v1153, %v1160
      %vm1162 = vcmp.eq.s32.totalorder %v1157, 1
      %vm1163 = vcmp.eq.s32.totalorder %v1161, 1
      %1164 = vrot.lane.b32.xlu0 %v1054, 16
      %v1165 = vpop.permute.xlu0 %1164
      %1166 = vrot.lane.b32.xlu0 %v1055, 16
      %v1167 = vpop.permute.xlu0 %1166
      %1168 = vrot.lane.b32.xlu0 %v1056, 16
      %v1169 = vpop.permute.xlu0 %1168
      %v1170 = vsel %vm320, %v1165, %v1167
      %v1171 = vsel %vm320, %v1167, %v1169
      %v1174 = vsel %vm1162, %v1170, 0.0
      %v1175 = vsel %vm1163, %v1171, 0.0
      %s1176 = scalar_lea.vmem %s3, 8
      %v1177 = vld [vmem:[%s1176] sm:$0xff]
      %1179 = vset.pattern.permute.xlu0 0
      %1180 = vperm.xlu0 %1179, %v1177
      %v1181 = vpop.permute.xlu0 %1180
      %v1183 = vlaneseq
      %v1184 = vshrl.u32 %v1183, 7
      %v1185 = vsub.s32 0, %v1184
      %v1186 = vrot.slane %v1174, %v1185
      %v1187 = vlaneseq
      %v1188 = vshrl.u32 %v1187, 7
      %v1189 = vsub.s32 0, %v1188
      %v1190 = vrot.slane %v1175, %v1189
      %v1191 = vmul.f32 %v1181, %v1186
      %v1192 = vmul.f32 %v1181, %v1190
      %v1193 = vadd.f32 %v1149, %v1191
      %v1194 = vadd.f32 %v1150, %v1192
      %1195 = vset.pattern.permute.xlu0 1
      %1196 = vperm.xlu0 %1195, %v1177
      %v1197 = vpop.permute.xlu0 %1196
      %v1199 = vlaneseq
      %v1200 = vshrl.u32 %v1199, 7
      %v1201 = vsub.s32 1, %v1200
      %v1202 = vrot.slane %v1174, %v1201
      %v1203 = vlaneseq
      %v1204 = vshrl.u32 %v1203, 7
      %v1205 = vsub.s32 1, %v1204
      %v1206 = vrot.slane %v1175, %v1205
      %v1207 = vmul.f32 %v1197, %v1202
      %v1208 = vmul.f32 %v1197, %v1206
      %v1209 = vadd.f32 %v1193, %v1207
      %v1210 = vadd.f32 %v1194, %v1208
      %1211 = vset.pattern.permute.xlu0 2
      %1212 = vperm.xlu0 %1211, %v1177
      %v1213 = vpop.permute.xlu0 %1212
      %v1215 = vlaneseq
      %v1216 = vshrl.u32 %v1215, 7
      %v1217 = vsub.s32 2, %v1216
      %v1218 = vrot.slane %v1174, %v1217
      %v1219 = vlaneseq
      %v1220 = vshrl.u32 %v1219, 7
      %v1221 = vsub.s32 2, %v1220
      %v1222 = vrot.slane %v1175, %v1221
      %v1223 = vmul.f32 %v1213, %v1218
      %v1224 = vmul.f32 %v1213, %v1222
      %v1225 = vadd.f32 %v1209, %v1223
      %v1226 = vadd.f32 %v1210, %v1224
      %1227 = vset.pattern.permute.xlu0 3
      %1228 = vperm.xlu0 %1227, %v1177
      %v1229 = vpop.permute.xlu0 %1228
      %v1231 = vlaneseq
      %v1232 = vshrl.u32 %v1231, 7
      %v1233 = vsub.s32 3, %v1232
      %v1234 = vrot.slane %v1174, %v1233
      %v1235 = vlaneseq
      %v1236 = vshrl.u32 %v1235, 7
      %v1237 = vsub.s32 3, %v1236
      %v1238 = vrot.slane %v1175, %v1237
      %v1239 = vmul.f32 %v1229, %v1234
      %v1240 = vmul.f32 %v1229, %v1238
      %v1241 = vadd.f32 %v1225, %v1239
      %v1242 = vadd.f32 %v1226, %v1240
      %v1243 = vld [vmem:[%s394] ss:$8 sm:$0x3]
      %vm1244 = vcmp.gt.f32.partialorder %v1243, 0.0
      %v1245 = vsel %vm1244, 1, 0
      %v1246 = vlaneseq
      %v1247 = vshrl.u32 %v1246, 7
      %v1248 = vsub.s32 0, %v1247
      %v1249 = vrot.slane %v1245, %v1248
      %v1250 = vlaneseq
      %v1251 = vshrl.u32 %v1250, 7
      %v1252 = vsub.s32 1, %v1251
      %v1253 = vrot.slane %v1245, %v1252
      %vm1254 = vcmp.eq.s32.totalorder %v1249, 1
      %vm1255 = vcmp.eq.s32.totalorder %v1253, 1
      %1256 = vrot.lane.b32.xlu0 %v1054, 15
      %v1257 = vpop.permute.xlu0 %1256
      %1258 = vrot.lane.b32.xlu0 %v1055, 15
      %v1259 = vpop.permute.xlu0 %1258
      %1260 = vrot.lane.b32.xlu0 %v1056, 15
      %v1261 = vpop.permute.xlu0 %1260
      %v1262 = vsel %vm414, %v1257, %v1259
      %v1263 = vsel %vm414, %v1259, %v1261
      %v1266 = vsel %vm1254, %v1262, 0.0
      %v1267 = vsel %vm1255, %v1263, 0.0
      %s1268 = scalar_lea.vmem %s3, 16
      %v1269 = vld [vmem:[%s1268] sm:$0xff]
      %1271 = vset.pattern.permute.xlu0 0
      %1272 = vperm.xlu0 %1271, %v1269
      %v1273 = vpop.permute.xlu0 %1272
      %v1275 = vlaneseq
      %v1276 = vshrl.u32 %v1275, 7
      %v1277 = vsub.s32 0, %v1276
      %v1278 = vrot.slane %v1266, %v1277
      %v1279 = vlaneseq
      %v1280 = vshrl.u32 %v1279, 7
      %v1281 = vsub.s32 0, %v1280
      %v1282 = vrot.slane %v1267, %v1281
      %v1283 = vmul.f32 %v1273, %v1278
      %v1284 = vmul.f32 %v1273, %v1282
      %v1285 = vadd.f32 %v1241, %v1283
      %v1286 = vadd.f32 %v1242, %v1284
      %1287 = vset.pattern.permute.xlu0 1
      %1288 = vperm.xlu0 %1287, %v1269
      %v1289 = vpop.permute.xlu0 %1288
      %v1291 = vlaneseq
      %v1292 = vshrl.u32 %v1291, 7
      %v1293 = vsub.s32 1, %v1292
      %v1294 = vrot.slane %v1266, %v1293
      %v1295 = vlaneseq
      %v1296 = vshrl.u32 %v1295, 7
      %v1297 = vsub.s32 1, %v1296
      %v1298 = vrot.slane %v1267, %v1297
      %v1299 = vmul.f32 %v1289, %v1294
      %v1300 = vmul.f32 %v1289, %v1298
      %v1301 = vadd.f32 %v1285, %v1299
      %v1302 = vadd.f32 %v1286, %v1300
      %1303 = vset.pattern.permute.xlu0 2
      %1304 = vperm.xlu0 %1303, %v1269
      %v1305 = vpop.permute.xlu0 %1304
      %v1307 = vlaneseq
      %v1308 = vshrl.u32 %v1307, 7
      %v1309 = vsub.s32 2, %v1308
      %v1310 = vrot.slane %v1266, %v1309
      %v1311 = vlaneseq
      %v1312 = vshrl.u32 %v1311, 7
      %v1313 = vsub.s32 2, %v1312
      %v1314 = vrot.slane %v1267, %v1313
      %v1315 = vmul.f32 %v1305, %v1310
      %v1316 = vmul.f32 %v1305, %v1314
      %v1317 = vadd.f32 %v1301, %v1315
      %v1318 = vadd.f32 %v1302, %v1316
      %1319 = vset.pattern.permute.xlu0 3
      %1320 = vperm.xlu0 %1319, %v1269
      %v1321 = vpop.permute.xlu0 %1320
      %v1323 = vlaneseq
      %v1324 = vshrl.u32 %v1323, 7
      %v1325 = vsub.s32 3, %v1324
      %v1326 = vrot.slane %v1266, %v1325
      %v1327 = vlaneseq
      %v1328 = vshrl.u32 %v1327, 7
      %v1329 = vsub.s32 3, %v1328
      %v1330 = vrot.slane %v1267, %v1329
      %v1331 = vmul.f32 %v1321, %v1326
      %v1332 = vmul.f32 %v1321, %v1330
      %v1333 = vadd.f32 %v1317, %v1331
      %v1334 = vadd.f32 %v1318, %v1332
      %v1335 = vld [vmem:[%s488] ss:$8 sm:$0x3]
      %vm1336 = vcmp.gt.f32.partialorder %v1335, 0.0
      %v1337 = vsel %vm1336, 1, 0
      %v1338 = vlaneseq
      %v1339 = vshrl.u32 %v1338, 7
      %v1340 = vsub.s32 0, %v1339
      %v1341 = vrot.slane %v1337, %v1340
      %v1342 = vlaneseq
      %v1343 = vshrl.u32 %v1342, 7
      %v1344 = vsub.s32 1, %v1343
      %v1345 = vrot.slane %v1337, %v1344
      %vm1346 = vcmp.eq.s32.totalorder %v1341, 1
      %vm1347 = vcmp.eq.s32.totalorder %v1345, 1
      %1348 = vrot.lane.b32.xlu0 %v1054, 1
      %v1349 = vpop.permute.xlu0 %1348
      %1350 = vrot.lane.b32.xlu0 %v1055, 1
      %v1351 = vpop.permute.xlu0 %1350
      %1352 = vrot.lane.b32.xlu0 %v1056, 1
      %v1353 = vpop.permute.xlu0 %1352
      %v1354 = vsel %vm508, %v1349, %v1351
      %v1355 = vsel %vm508, %v1351, %v1353
      %v1358 = vsel %vm1346, %v1354, 0.0
      %v1359 = vsel %vm1347, %v1355, 0.0
      %s1360 = scalar_lea.vmem %s3, 24
      %v1361 = vld [vmem:[%s1360] sm:$0xff]
      %1363 = vset.pattern.permute.xlu0 0
      %1364 = vperm.xlu0 %1363, %v1361
      %v1365 = vpop.permute.xlu0 %1364
      %v1367 = vlaneseq
      %v1368 = vshrl.u32 %v1367, 7
      %v1369 = vsub.s32 0, %v1368
      %v1370 = vrot.slane %v1358, %v1369
      %v1371 = vlaneseq
      %v1372 = vshrl.u32 %v1371, 7
      %v1373 = vsub.s32 0, %v1372
      %v1374 = vrot.slane %v1359, %v1373
      %v1375 = vmul.f32 %v1365, %v1370
      %v1376 = vmul.f32 %v1365, %v1374
      %v1377 = vadd.f32 %v1333, %v1375
      %v1378 = vadd.f32 %v1334, %v1376
      %1379 = vset.pattern.permute.xlu0 1
      %1380 = vperm.xlu0 %1379, %v1361
      %v1381 = vpop.permute.xlu0 %1380
      %v1383 = vlaneseq
      %v1384 = vshrl.u32 %v1383, 7
      %v1385 = vsub.s32 1, %v1384
      %v1386 = vrot.slane %v1358, %v1385
      %v1387 = vlaneseq
      %v1388 = vshrl.u32 %v1387, 7
      %v1389 = vsub.s32 1, %v1388
      %v1390 = vrot.slane %v1359, %v1389
      %v1391 = vmul.f32 %v1381, %v1386
      %v1392 = vmul.f32 %v1381, %v1390
      %v1393 = vadd.f32 %v1377, %v1391
      %v1394 = vadd.f32 %v1378, %v1392
      %1395 = vset.pattern.permute.xlu0 2
      %1396 = vperm.xlu0 %1395, %v1361
      %v1397 = vpop.permute.xlu0 %1396
      %v1399 = vlaneseq
      %v1400 = vshrl.u32 %v1399, 7
      %v1401 = vsub.s32 2, %v1400
      %v1402 = vrot.slane %v1358, %v1401
      %v1403 = vlaneseq
      %v1404 = vshrl.u32 %v1403, 7
      %v1405 = vsub.s32 2, %v1404
      %v1406 = vrot.slane %v1359, %v1405
      %v1407 = vmul.f32 %v1397, %v1402
      %v1408 = vmul.f32 %v1397, %v1406
      %v1409 = vadd.f32 %v1393, %v1407
      %v1410 = vadd.f32 %v1394, %v1408
      %1411 = vset.pattern.permute.xlu0 3
      %1412 = vperm.xlu0 %1411, %v1361
      %v1413 = vpop.permute.xlu0 %1412
      %v1415 = vlaneseq
      %v1416 = vshrl.u32 %v1415, 7
      %v1417 = vsub.s32 3, %v1416
      %v1418 = vrot.slane %v1358, %v1417
      %v1419 = vlaneseq
      %v1420 = vshrl.u32 %v1419, 7
      %v1421 = vsub.s32 3, %v1420
      %v1422 = vrot.slane %v1359, %v1421
      %v1423 = vmul.f32 %v1413, %v1418
      %v1424 = vmul.f32 %v1413, %v1422
      %v1425 = vadd.f32 %v1409, %v1423
      %v1426 = vadd.f32 %v1410, %v1424
      %s1427 = scalar_lea.vmem %s3, 32
      %v1428 = vld [vmem:[%s1427] sm:$0xff]
      %1430 = vset.pattern.permute.xlu0 0
      %1431 = vperm.xlu0 %1430, %v1428
      %v1432 = vpop.permute.xlu0 %1431
      %v1434 = vlaneseq
      %v1435 = vshrl.u32 %v1434, 7
      %v1436 = vsub.s32 0, %v1435
      %v1437 = vrot.slane %v1055, %v1436
      %v1438 = vlaneseq
      %v1439 = vshrl.u32 %v1438, 7
      %v1440 = vsub.s32 0, %v1439
      %v1441 = vrot.slane %v1056, %v1440
      %v1442 = vmul.f32 %v1432, %v1437
      %v1443 = vmul.f32 %v1432, %v1441
      %v1444 = vadd.f32 %v1425, %v1442
      %v1445 = vadd.f32 %v1426, %v1443
      %1446 = vset.pattern.permute.xlu0 1
      %1447 = vperm.xlu0 %1446, %v1428
      %v1448 = vpop.permute.xlu0 %1447
      %v1450 = vlaneseq
      %v1451 = vshrl.u32 %v1450, 7
      %v1452 = vsub.s32 1, %v1451
      %v1453 = vrot.slane %v1055, %v1452
      %v1454 = vlaneseq
      %v1455 = vshrl.u32 %v1454, 7
      %v1456 = vsub.s32 1, %v1455
      %v1457 = vrot.slane %v1056, %v1456
      %v1458 = vmul.f32 %v1448, %v1453
      %v1459 = vmul.f32 %v1448, %v1457
      %v1460 = vadd.f32 %v1444, %v1458
      %v1461 = vadd.f32 %v1445, %v1459
      %1462 = vset.pattern.permute.xlu0 2
      %1463 = vperm.xlu0 %1462, %v1428
      %v1464 = vpop.permute.xlu0 %1463
      %v1466 = vlaneseq
      %v1467 = vshrl.u32 %v1466, 7
      %v1468 = vsub.s32 2, %v1467
      %v1469 = vrot.slane %v1055, %v1468
      %v1470 = vlaneseq
      %v1471 = vshrl.u32 %v1470, 7
      %v1472 = vsub.s32 2, %v1471
      %v1473 = vrot.slane %v1056, %v1472
      %v1474 = vmul.f32 %v1464, %v1469
      %v1475 = vmul.f32 %v1464, %v1473
      %v1476 = vadd.f32 %v1460, %v1474
      %v1477 = vadd.f32 %v1461, %v1475
      %1478 = vset.pattern.permute.xlu0 3
      %1479 = vperm.xlu0 %1478, %v1428
      %v1480 = vpop.permute.xlu0 %1479
      %v1482 = vlaneseq
      %v1483 = vshrl.u32 %v1482, 7
      %v1484 = vsub.s32 3, %v1483
      %v1485 = vrot.slane %v1055, %v1484
      %v1486 = vlaneseq
      %v1487 = vshrl.u32 %v1486, 7
      %v1488 = vsub.s32 3, %v1487
      %v1489 = vrot.slane %v1056, %v1488
      %v1490 = vmul.f32 %v1480, %v1485
      %v1491 = vmul.f32 %v1480, %v1489
      %v1492 = vadd.f32 %v1476, %v1490
      %v1493 = vadd.f32 %v1477, %v1491
      %v1494 = vld [vmem:[#allocation2 + $0x8] sm:$0xff]
      %v1495 = vld [vmem:[#allocation2 + $0x10] sm:$0xff]
      %v1496 = vld [vmem:[#allocation2 + $0x18] sm:$0xff]
      %v1497 = vld [vmem:[%s652] ss:$8 sm:$0x3]
      %vm1498 = vcmp.gt.f32.partialorder %v1497, 0.0
      %v1499 = vsel %vm1498, 1, 0
      %v1500 = vlaneseq
      %v1501 = vshrl.u32 %v1500, 7
      %v1502 = vsub.s32 0, %v1501
      %v1503 = vrot.slane %v1499, %v1502
      %v1504 = vlaneseq
      %v1505 = vshrl.u32 %v1504, 7
      %v1506 = vsub.s32 1, %v1505
      %v1507 = vrot.slane %v1499, %v1506
      %vm1508 = vcmp.eq.s32.totalorder %v1503, 1
      %vm1509 = vcmp.eq.s32.totalorder %v1507, 1
      %1513 = vrot.lane.b32.xlu0 %v1494, 127
      %v1514 = vpop.permute.xlu0 %1513
      %1515 = vrot.lane.b32.xlu0 %v1495, 127
      %v1516 = vpop.permute.xlu0 %1515
      %1517 = vrot.lane.b32.xlu0 %v1496, 127
      %v1518 = vpop.permute.xlu0 %1517
      %v1519 = vsel %vm675, %v1514, %v1516
      %v1520 = vsel %vm675, %v1516, %v1518
      %v1523 = vsel %vm1508, %v1519, 0.0
      %v1524 = vsel %vm1509, %v1520, 0.0
      %s1525 = scalar_lea.vmem %s3, 40
      %v1526 = vld [vmem:[%s1525] sm:$0xff]
      %1528 = vset.pattern.permute.xlu0 0
      %1529 = vperm.xlu0 %1528, %v1526
      %v1530 = vpop.permute.xlu0 %1529
      %v1532 = vlaneseq
      %v1533 = vshrl.u32 %v1532, 7
      %v1534 = vsub.s32 0, %v1533
      %v1535 = vrot.slane %v1523, %v1534
      %v1536 = vlaneseq
      %v1537 = vshrl.u32 %v1536, 7
      %v1538 = vsub.s32 0, %v1537
      %v1539 = vrot.slane %v1524, %v1538
      %v1540 = vmul.f32 %v1530, %v1535
      %v1541 = vmul.f32 %v1530, %v1539
      %v1542 = vadd.f32 %v1492, %v1540
      %v1543 = vadd.f32 %v1493, %v1541
      %1544 = vset.pattern.permute.xlu0 1
      %1545 = vperm.xlu0 %1544, %v1526
      %v1546 = vpop.permute.xlu0 %1545
      %v1548 = vlaneseq
      %v1549 = vshrl.u32 %v1548, 7
      %v1550 = vsub.s32 1, %v1549
      %v1551 = vrot.slane %v1523, %v1550
      %v1552 = vlaneseq
      %v1553 = vshrl.u32 %v1552, 7
      %v1554 = vsub.s32 1, %v1553
      %v1555 = vrot.slane %v1524, %v1554
      %v1556 = vmul.f32 %v1546, %v1551
      %v1557 = vmul.f32 %v1546, %v1555
      %v1558 = vadd.f32 %v1542, %v1556
      %v1559 = vadd.f32 %v1543, %v1557
      %1560 = vset.pattern.permute.xlu0 2
      %1561 = vperm.xlu0 %1560, %v1526
      %v1562 = vpop.permute.xlu0 %1561
      %v1564 = vlaneseq
      %v1565 = vshrl.u32 %v1564, 7
      %v1566 = vsub.s32 2, %v1565
      %v1567 = vrot.slane %v1523, %v1566
      %v1568 = vlaneseq
      %v1569 = vshrl.u32 %v1568, 7
      %v1570 = vsub.s32 2, %v1569
      %v1571 = vrot.slane %v1524, %v1570
      %v1572 = vmul.f32 %v1562, %v1567
      %v1573 = vmul.f32 %v1562, %v1571
      %v1574 = vadd.f32 %v1558, %v1572
      %v1575 = vadd.f32 %v1559, %v1573
      %1576 = vset.pattern.permute.xlu0 3
      %1577 = vperm.xlu0 %1576, %v1526
      %v1578 = vpop.permute.xlu0 %1577
      %v1580 = vlaneseq
      %v1581 = vshrl.u32 %v1580, 7
      %v1582 = vsub.s32 3, %v1581
      %v1583 = vrot.slane %v1523, %v1582
      %v1584 = vlaneseq
      %v1585 = vshrl.u32 %v1584, 7
      %v1586 = vsub.s32 3, %v1585
      %v1587 = vrot.slane %v1524, %v1586
      %v1588 = vmul.f32 %v1578, %v1583
      %v1589 = vmul.f32 %v1578, %v1587
      %v1590 = vadd.f32 %v1574, %v1588
      %v1591 = vadd.f32 %v1575, %v1589
      %v1592 = vld [vmem:[%s749] ss:$8 sm:$0x3]
      %vm1593 = vcmp.gt.f32.partialorder %v1592, 0.0
      %v1594 = vsel %vm1593, 1, 0
      %v1595 = vlaneseq
      %v1596 = vshrl.u32 %v1595, 7
      %v1597 = vsub.s32 0, %v1596
      %v1598 = vrot.slane %v1594, %v1597
      %v1599 = vlaneseq
      %v1600 = vshrl.u32 %v1599, 7
      %v1601 = vsub.s32 1, %v1600
      %v1602 = vrot.slane %v1594, %v1601
      %vm1603 = vcmp.eq.s32.totalorder %v1598, 1
      %vm1604 = vcmp.eq.s32.totalorder %v1602, 1
      %1605 = vrot.lane.b32.xlu0 %v1494, 113
      %v1606 = vpop.permute.xlu0 %1605
      %1607 = vrot.lane.b32.xlu0 %v1495, 113
      %v1608 = vpop.permute.xlu0 %1607
      %1609 = vrot.lane.b32.xlu0 %v1496, 113
      %v1610 = vpop.permute.xlu0 %1609
      %v1611 = vsel %vm769, %v1606, %v1608
      %v1612 = vsel %vm769, %v1608, %v1610
      %v1615 = vsel %vm1603, %v1611, 0.0
      %v1616 = vsel %vm1604, %v1612, 0.0
      %s1617 = scalar_lea.vmem %s3, 48
      %v1618 = vld [vmem:[%s1617] sm:$0xff]
      %1620 = vset.pattern.permute.xlu0 0
      %1621 = vperm.xlu0 %1620, %v1618
      %v1622 = vpop.permute.xlu0 %1621
      %v1624 = vlaneseq
      %v1625 = vshrl.u32 %v1624, 7
      %v1626 = vsub.s32 0, %v1625
      %v1627 = vrot.slane %v1615, %v1626
      %v1628 = vlaneseq
      %v1629 = vshrl.u32 %v1628, 7
      %v1630 = vsub.s32 0, %v1629
      %v1631 = vrot.slane %v1616, %v1630
      %v1632 = vmul.f32 %v1622, %v1627
      %v1633 = vmul.f32 %v1622, %v1631
      %v1634 = vadd.f32 %v1590, %v1632
      %v1635 = vadd.f32 %v1591, %v1633
      %1636 = vset.pattern.permute.xlu0 1
      %1637 = vperm.xlu0 %1636, %v1618
      %v1638 = vpop.permute.xlu0 %1637
      %v1640 = vlaneseq
      %v1641 = vshrl.u32 %v1640, 7
      %v1642 = vsub.s32 1, %v1641
      %v1643 = vrot.slane %v1615, %v1642
      %v1644 = vlaneseq
      %v1645 = vshrl.u32 %v1644, 7
      %v1646 = vsub.s32 1, %v1645
      %v1647 = vrot.slane %v1616, %v1646
      %v1648 = vmul.f32 %v1638, %v1643
      %v1649 = vmul.f32 %v1638, %v1647
      %v1650 = vadd.f32 %v1634, %v1648
      %v1651 = vadd.f32 %v1635, %v1649
      %1652 = vset.pattern.permute.xlu0 2
      %1653 = vperm.xlu0 %1652, %v1618
      %v1654 = vpop.permute.xlu0 %1653
      %v1656 = vlaneseq
      %v1657 = vshrl.u32 %v1656, 7
      %v1658 = vsub.s32 2, %v1657
      %v1659 = vrot.slane %v1615, %v1658
      %v1660 = vlaneseq
      %v1661 = vshrl.u32 %v1660, 7
      %v1662 = vsub.s32 2, %v1661
      %v1663 = vrot.slane %v1616, %v1662
      %v1664 = vmul.f32 %v1654, %v1659
      %v1665 = vmul.f32 %v1654, %v1663
      %v1666 = vadd.f32 %v1650, %v1664
      %v1667 = vadd.f32 %v1651, %v1665
      %1668 = vset.pattern.permute.xlu0 3
      %1669 = vperm.xlu0 %1668, %v1618
      %v1670 = vpop.permute.xlu0 %1669
      %v1672 = vlaneseq
      %v1673 = vshrl.u32 %v1672, 7
      %v1674 = vsub.s32 3, %v1673
      %v1675 = vrot.slane %v1615, %v1674
      %v1676 = vlaneseq
      %v1677 = vshrl.u32 %v1676, 7
      %v1678 = vsub.s32 3, %v1677
      %v1679 = vrot.slane %v1616, %v1678
      %v1680 = vmul.f32 %v1670, %v1675
      %v1681 = vmul.f32 %v1670, %v1679
      %v1682 = vadd.f32 %v1666, %v1680
      %v1683 = vadd.f32 %v1667, %v1681
      %v1684 = vld [vmem:[%s843] ss:$8 sm:$0x3]
      %vm1685 = vcmp.gt.f32.partialorder %v1684, 0.0
      %v1686 = vsel %vm1685, 1, 0
      %v1687 = vlaneseq
      %v1688 = vshrl.u32 %v1687, 7
      %v1689 = vsub.s32 0, %v1688
      %v1690 = vrot.slane %v1686, %v1689
      %v1691 = vlaneseq
      %v1692 = vshrl.u32 %v1691, 7
      %v1693 = vsub.s32 1, %v1692
      %v1694 = vrot.slane %v1686, %v1693
      %vm1695 = vcmp.eq.s32.totalorder %v1690, 1
      %vm1696 = vcmp.eq.s32.totalorder %v1694, 1
      %1697 = vrot.lane.b32.xlu0 %v1494, 112
      %v1698 = vpop.permute.xlu0 %1697
      %1699 = vrot.lane.b32.xlu0 %v1495, 112
      %v1700 = vpop.permute.xlu0 %1699
      %1701 = vrot.lane.b32.xlu0 %v1496, 112
      %v1702 = vpop.permute.xlu0 %1701
      %v1703 = vsel %vm863, %v1698, %v1700
      %v1704 = vsel %vm863, %v1700, %v1702
      %v1707 = vsel %vm1695, %v1703, 0.0
      %v1708 = vsel %vm1696, %v1704, 0.0
      %s1709 = scalar_lea.vmem %s3, 56
      %v1710 = vld [vmem:[%s1709] sm:$0xff]
      %1712 = vset.pattern.permute.xlu0 0
      %1713 = vperm.xlu0 %1712, %v1710
      %v1714 = vpop.permute.xlu0 %1713
      %v1716 = vlaneseq
      %v1717 = vshrl.u32 %v1716, 7
      %v1718 = vsub.s32 0, %v1717
      %v1719 = vrot.slane %v1707, %v1718
      %v1720 = vlaneseq
      %v1721 = vshrl.u32 %v1720, 7
      %v1722 = vsub.s32 0, %v1721
      %v1723 = vrot.slane %v1708, %v1722
      %v1724 = vmul.f32 %v1714, %v1719
      %v1725 = vmul.f32 %v1714, %v1723
      %v1726 = vadd.f32 %v1682, %v1724
      %v1727 = vadd.f32 %v1683, %v1725
      %1728 = vset.pattern.permute.xlu0 1
      %1729 = vperm.xlu0 %1728, %v1710
      %v1730 = vpop.permute.xlu0 %1729
      %v1732 = vlaneseq
      %v1733 = vshrl.u32 %v1732, 7
      %v1734 = vsub.s32 1, %v1733
      %v1735 = vrot.slane %v1707, %v1734
      %v1736 = vlaneseq
      %v1737 = vshrl.u32 %v1736, 7
      %v1738 = vsub.s32 1, %v1737
      %v1739 = vrot.slane %v1708, %v1738
      %v1740 = vmul.f32 %v1730, %v1735
      %v1741 = vmul.f32 %v1730, %v1739
      %v1742 = vadd.f32 %v1726, %v1740
      %v1743 = vadd.f32 %v1727, %v1741
      %1744 = vset.pattern.permute.xlu0 2
      %1745 = vperm.xlu0 %1744, %v1710
      %v1746 = vpop.permute.xlu0 %1745
      %v1748 = vlaneseq
      %v1749 = vshrl.u32 %v1748, 7
      %v1750 = vsub.s32 2, %v1749
      %v1751 = vrot.slane %v1707, %v1750
      %v1752 = vlaneseq
      %v1753 = vshrl.u32 %v1752, 7
      %v1754 = vsub.s32 2, %v1753
      %v1755 = vrot.slane %v1708, %v1754
      %v1756 = vmul.f32 %v1746, %v1751
      %v1757 = vmul.f32 %v1746, %v1755
      %v1758 = vadd.f32 %v1742, %v1756
      %v1759 = vadd.f32 %v1743, %v1757
      %1760 = vset.pattern.permute.xlu0 3
      %1761 = vperm.xlu0 %1760, %v1710
      %v1762 = vpop.permute.xlu0 %1761
      %v1764 = vlaneseq
      %v1765 = vshrl.u32 %v1764, 7
      %v1766 = vsub.s32 3, %v1765
      %v1767 = vrot.slane %v1707, %v1766
      %v1768 = vlaneseq
      %v1769 = vshrl.u32 %v1768, 7
      %v1770 = vsub.s32 3, %v1769
      %v1771 = vrot.slane %v1708, %v1770
      %v1772 = vmul.f32 %v1762, %v1767
      %v1773 = vmul.f32 %v1762, %v1771
      %v1774 = vadd.f32 %v1758, %v1772
      %v1775 = vadd.f32 %v1759, %v1773
      %v1776 = vld [vmem:[%s937] ss:$8 sm:$0x3]
      %vm1777 = vcmp.gt.f32.partialorder %v1776, 0.0
      %v1778 = vsel %vm1777, 1, 0
      %v1779 = vlaneseq
      %v1780 = vshrl.u32 %v1779, 7
      %v1781 = vsub.s32 0, %v1780
      %v1782 = vrot.slane %v1778, %v1781
      %v1783 = vlaneseq
      %v1784 = vshrl.u32 %v1783, 7
      %v1785 = vsub.s32 1, %v1784
      %v1786 = vrot.slane %v1778, %v1785
      %vm1787 = vcmp.eq.s32.totalorder %v1782, 1
      %vm1788 = vcmp.eq.s32.totalorder %v1786, 1
      %1789 = vrot.lane.b32.xlu0 %v1494, 111
      %v1790 = vpop.permute.xlu0 %1789
      %1791 = vrot.lane.b32.xlu0 %v1495, 111
      %v1792 = vpop.permute.xlu0 %1791
      %1793 = vrot.lane.b32.xlu0 %v1496, 111
      %v1794 = vpop.permute.xlu0 %1793
      %v1795 = vsel %vm957, %v1790, %v1792
      %v1796 = vsel %vm957, %v1792, %v1794
      %v1799 = vsel %vm1787, %v1795, 0.0
      %v1800 = vsel %vm1788, %v1796, 0.0
      %s1801 = scalar_lea.vmem %s3, 64
      %v1802 = vld [vmem:[%s1801] sm:$0xff]
      %1804 = vset.pattern.permute.xlu0 0
      %1805 = vperm.xlu0 %1804, %v1802
      %v1806 = vpop.permute.xlu0 %1805
      %v1808 = vlaneseq
      %v1809 = vshrl.u32 %v1808, 7
      %v1810 = vsub.s32 0, %v1809
      %v1811 = vrot.slane %v1799, %v1810
      %v1812 = vlaneseq
      %v1813 = vshrl.u32 %v1812, 7
      %v1814 = vsub.s32 0, %v1813
      %v1815 = vrot.slane %v1800, %v1814
      %v1816 = vmul.f32 %v1806, %v1811
      %v1817 = vmul.f32 %v1806, %v1815
      %v1818 = vadd.f32 %v1774, %v1816
      %v1819 = vadd.f32 %v1775, %v1817
      %1820 = vset.pattern.permute.xlu0 1
      %1821 = vperm.xlu0 %1820, %v1802
      %v1822 = vpop.permute.xlu0 %1821
      %v1824 = vlaneseq
      %v1825 = vshrl.u32 %v1824, 7
      %v1826 = vsub.s32 1, %v1825
      %v1827 = vrot.slane %v1799, %v1826
      %v1828 = vlaneseq
      %v1829 = vshrl.u32 %v1828, 7
      %v1830 = vsub.s32 1, %v1829
      %v1831 = vrot.slane %v1800, %v1830
      %v1832 = vmul.f32 %v1822, %v1827
      %v1833 = vmul.f32 %v1822, %v1831
      %v1834 = vadd.f32 %v1818, %v1832
      %v1835 = vadd.f32 %v1819, %v1833
      %1836 = vset.pattern.permute.xlu0 2
      %1837 = vperm.xlu0 %1836, %v1802
      %v1838 = vpop.permute.xlu0 %1837
      %v1840 = vlaneseq
      %v1841 = vshrl.u32 %v1840, 7
      %v1842 = vsub.s32 2, %v1841
      %v1843 = vrot.slane %v1799, %v1842
      %v1844 = vlaneseq
      %v1845 = vshrl.u32 %v1844, 7
      %v1846 = vsub.s32 2, %v1845
      %v1847 = vrot.slane %v1800, %v1846
      %v1848 = vmul.f32 %v1838, %v1843
      %v1849 = vmul.f32 %v1838, %v1847
      %v1850 = vadd.f32 %v1834, %v1848
      %v1851 = vadd.f32 %v1835, %v1849
      %1852 = vset.pattern.permute.xlu0 3
      %1853 = vperm.xlu0 %1852, %v1802
      %v1854 = vpop.permute.xlu0 %1853
      %v1856 = vlaneseq
      %v1857 = vshrl.u32 %v1856, 7
      %v1858 = vsub.s32 3, %v1857
      %v1859 = vrot.slane %v1799, %v1858
      %v1860 = vlaneseq
      %v1861 = vshrl.u32 %v1860, 7
      %v1862 = vsub.s32 3, %v1861
      %v1863 = vrot.slane %v1800, %v1862
      %v1864 = vmul.f32 %v1854, %v1859
      %v1865 = vmul.f32 %v1854, %v1863
      %v1866 = vadd.f32 %v1850, %v1864
      %v1867 = vadd.f32 %v1851, %v1865
      %v1868 = vadd.f32 %v1866, %v1867
      %1869 = vadd.xlane.f32.xlu0 %v1868
      %v1870 = vpop.xlane.xlu0 %1869
      %v1871 = vmul.f32 %v1870, 0.00390625
      %v1872 = vmul.f32 %v1866, %v1866
      %v1873 = vmul.f32 %v1867, %v1867
      %v1874 = vadd.f32 %v1872, %v1873
      %1875 = vadd.xlane.f32.xlu0 %v1874
      %v1876 = vpop.xlane.xlu0 %1875
      %v1877 = vmul.f32 %v1876, 0.00390625
      %v1878 = vmul.f32 %v1871, %v1871
      %v1879 = vsub.f32 %v1877, %v1878
      %v1880 = vmax.f32 %v1879, 0.0
      %v1881 = vsub.f32 %v1866, %v1871
      %v1882 = vsub.f32 %v1867, %v1871
      %v1883 = vadd.f32 %v1880, 1e-05
      %v1884 = vrsqrt.pop %v1883
      %v1885 = vmul.f32 %v1881, %v1884
      %v1886 = vmul.f32 %v1882, %v1884
      %v1887 = vld [vmem:[%s192] sm:$0xff]
      %v1888 = vld [vmem:[%s192 + $0x8] sm:$0xff]
      %v1889 = vadd.f32 %v1887, %v1885
      %v1890 = vadd.f32 %v1888, %v1886
      %1891 = vst [vmem:[%s197] sm:$0xff] %v1889
      %1892 = vst [vmem:[%s197 + $0x8] sm:$0xff] %v1890
      %p1893 = scmp.lt.s32.totalorder %s15, 1
      %s1894 = scalar_select %p1893, %s15, 1
      %s1895 = smul.addr %s1894, 2
      %s1896 = smul.addr %s1895, 8
      %s1897 = scalar_lea.vmem %s4, %s1896
      // Predicated region
      $region37: #{resblock_pallas.1} parent=35 // pred_check
        %p1898 = pneg %p122
      $region38: #{resblock_pallas.1} parent=35 // pred_check_branch
        %1900 = sbr.rel (%p1898) target = $region40
      $region39: #{resblock_pallas.1} parent=35 // pred_region
        _
      $region40: #{resblock_pallas.1} parent=35 // pred_fallthru
        _
    $region36: #{resblock_pallas.1} parent=5 // pred_fallthru
      _
    %p1901 = scmp.le.s32.totalorder 2, %s10
    // Predicated region
    $region41: #{resblock_pallas.1} parent=5 // pred_check
      %p1902 = pneg %p1901
    $region42: #{resblock_pallas.1} parent=5 // pred_check_branch
      %1904 = sbr.rel (%p1902) target = $region44
    $region43: #{resblock_pallas.1} parent=5 // pred_region
      %s1905 = ssub.s32 %s10, 2
      // Predicated region
      $region45: #{resblock_pallas.1} parent=43 // pred_check
        %p1906 = pneg %p128
      $region46: #{resblock_pallas.1} parent=43 // pred_check_branch
        %1908 = sbr.rel (%p1906) target = $region48
      $region47: #{resblock_pallas.1} parent=43 // pred_region
        %p1909 = scmp.lt.s32.totalorder %s16, 1
        %s1910 = scalar_select %p1909, %s16, 1
        %s1911 = smul.addr %s1910, 2
        %s1912 = smul.addr %s1911, 8
        %s1913 = scalar_lea.vmem %s4, %s1912
      $region48: #{resblock_pallas.1} parent=43 // pred_fallthru
        _
    $region44: #{resblock_pallas.1} parent=5 // pred_fallthru
      _
  $region6: #{resblock_pallas.1} parent=0 // loop_footer
    %s14 = sadd.s32 1, %s10
  $region7: #{resblock_pallas.1} parent=0 // loop_footer_branch
    %9 = sbr.rel target = $region3
  $region8: #{resblock_pallas.1} parent=0 // loop_exit
    _

</llo_original>
